<compile_context>
chip_gen: v6e
topology: v6e:2x2x1
jax: 0.10.0
libtpu: 0.0.40
codegen_flags: <defaults>
</compile_context>

<pallas_src>
import jax
import jax.numpy as jnp
from jax import lax
from jax.experimental import pallas as pl
from jax.experimental.pallas import tpu as pltpu


# ---------------------------------------------------------------- kernel ----

def fused_proxy_loss_kernel(lab_ref, x_ref, w_ref, b_ref, pall_ref, p2_ref,
                            emb_ref, loss_ref, corr_ref):
    """Fused backbone + masked-proxy distance + softmax-CE + top-1 correctness.

    Grid point = one batch tile of TB samples.
      lab_ref  : [n_cond, TB] int32   labels per condition
      x_ref    : [TB, F]              flattened images
      w_ref    : [F, D], b_ref [1, D] embedding backbone (VMEM-resident)
      pall_ref : [NK, D]              all conditions' masked proxies, zero-padded
      p2_ref   : [NK, 1]              ||masked proxy||^2 (+1e30 on padded rows)
      emb_ref  : [TB, D]              embedding (for reg_e / downstream use)
      loss_ref : [n_cond, TB]         per-sample CE loss (lane-dense)
      corr_ref : [n_cond, TB]         1.0 iff nearest proxy == label (lane-dense)

    dist = ||x*m - p*m||^2 = ||x*m||^2 + ||p*m||^2 - 2 x.(p*m) (binary mask m).
    The per-sample constant ||x*m||^2 cancels in both softmax-CE and argmin, so
    only one MXU dot remains.  Everything is laid out with proxies on sublanes
    and batch on lanes so the reductions come out lane-dense.
    """
    n_cond = loss_ref.shape[0]

    # Backbone: emb = x @ W + b  (default MXU precision).
    emb = jnp.dot(x_ref[...], w_ref[...],
                  preferred_element_type=jnp.float32) + b_ref[...]      # [TB, D]
    emb_ref[...] = emb

    # All-condition distance dot:  xp[k, b] = p_all[k, :] . emb[b, :]
    xp = lax.dot_general(pall_ref[...], emb, (((1,), (1,)), ((), ())),
                         preferred_element_type=jnp.float32)            # [NK, TB]
    # shifted logits = -(dist - ||x*m||^2) = 2*x.pm - ||pm||^2
    # padded proxy rows: xp == 0 and p2 == +1e30  ->  logits == -1e30 (masked out)
    logits = 2.0 * xp - p2_ref[...]                                     # [NK, TB]

    nk, tb = logits.shape
    k_pad = nk // n_cond
    krow = lax.broadcasted_iota(jnp.int32, (k_pad, tb), 0)

    for c in range(n_cond):                       # static, unrolled (n_cond small)
        seg = logits[c * k_pad:(c + 1) * k_pad, :]                      # [K_pad, TB]
        lab = lab_ref[pl.ds(c, 1), :]                                   # [1, TB]

        cmax = jnp.max(seg, axis=0, keepdims=True)                      # [1, TB]
        lse = cmax + jnp.log(
            jnp.sum(jnp.exp(seg - cmax), axis=0, keepdims=True))
        picked = jnp.sum(jnp.where(krow == lab, seg, 0.0),
                         axis=0, keepdims=True)                         # [1, TB]
        # first-index argmax of logits == first-index argmin of dist
        amin = jnp.min(jnp.where(seg >= cmax, krow, k_pad),
                       axis=0, keepdims=True)                           # [1, TB]

        loss_ref[pl.ds(c, 1), :] = lse - picked
        corr_ref[pl.ds(c, 1), :] = (amin == lab).astype(jnp.float32)


# ---------------------------------------------------------------- wrapper ---

def _tile_batch(B, max_tile=512):
    """Pick a batch tile (multiple of 8; multiple of 128 if multi-step) and the
    padded batch size.  No divisibility asserts — the batch is padded instead."""
    if B <= max_tile:
        bp = ((B + 7) // 8) * 8
        return bp, bp                               # single tile == full padded batch
    tb = max_tile                                   # multiple of 128 (lane-dim blocks)
    bp = ((B + tb - 1) // tb) * tb
    return tb, bp


def _fused_forward_pallas(x_flat, labels_cm, params, prep, tb):
    bp, f = x_flat.shape
    d = params["emb_w"].shape[1]
    n_cond = labels_cm.shape[0]
    nk = prep["p_all"].shape[0]

    emb, loss, corr = pl.pallas_call(
        fused_proxy_loss_kernel,
        out_shape=(
            jax.ShapeDtypeStruct((bp, d), jnp.float32),
            jax.ShapeDtypeStruct((n_cond, bp), jnp.float32),
            jax.ShapeDtypeStruct((n_cond, bp), jnp.float32),
        ),
        grid=(bp // tb,),
        in_specs=[
            pl.BlockSpec((n_cond, tb), lambda i: (0, i)),     # labels
            pl.BlockSpec((tb, f), lambda i: (i, 0)),          # x
            pl.BlockSpec((f, d), lambda i: (0, 0)),           # W   (resident)
            pl.BlockSpec((1, d), lambda i: (0, 0)),           # b   (resident)
            pl.BlockSpec((nk, d), lambda i: (0, 0)),          # proxies (resident)
            pl.BlockSpec((nk, 1), lambda i: (0, 0)),          # ||p||^2 (resident)
        ],
        out_specs=(
            pl.BlockSpec((tb, d), lambda i: (i, 0)),          # emb
            pl.BlockSpec((n_cond, tb), lambda i: (0, i)),     # loss (lane-dense)
            pl.BlockSpec((n_cond, tb), lambda i: (0, i)),     # corr (lane-dense)
        ),
        compiler_params=pltpu.CompilerParams(
            dimension_semantics=("parallel",),
            vmem_limit_bytes=32 * 1024 * 1024),
    )(labels_cm, x_flat, params["emb_w"], params["emb_b"],
      prep["p_all"], prep["p2"])
    return emb, loss, corr


def prepare_proxy_params(params):
    """One-time parameter layout transform (hoisted out of the forward path).

    Stacks every condition's mask-applied, zero-padded proxy table into a single
    [n_cond*K_pad, D] matrix and precomputes ||masked proxy||^2 with a +1e30
    sentinel on padded rows (so padded logits come out at -1e30)."""
    proxies = params["proxies"]                 # list of [K_c, D]
    masks = params["cond_masks"]                # [n_cond, D] binary
    n_cond = len(proxies)
    D = masks.shape[1]
    k_max = max(int(p.shape[0]) for p in proxies)
    k_pad = max(128, ((k_max + 127) // 128) * 128)     # lane-dense segments

    p_all = jnp.zeros((n_cond * k_pad, D), jnp.float32)
    p2 = jnp.full((n_cond * k_pad, 1), 1e30, jnp.float32)
    for c, p in enumerate(proxies):
        k = int(p.shape[0])
        pm = p * masks[c][None, :]
        p_all = p_all.at[c * k_pad:c * k_pad + k, :].set(pm)
        p2 = p2.at[c * k_pad:c * k_pad + k, :].set(
            jnp.sum(pm * pm, axis=1, keepdims=True))
    return {"p_all": p_all, "p2": p2}


def _aggregate(loss_all, corr_all, m_attr_mat, emb, n_attr):
    """Shared loss/accuracy aggregation (mirrors ProxyLoss.forward, mode='concat')."""
    loss_attr, corr_attr = loss_all[:n_attr], corr_all[:n_attr]
    loss_cp, corr_cp = loss_all[n_attr], corr_all[n_attr]
    loss_ip, corr_ip = loss_all[n_attr + 1], corr_all[n_attr + 1]

    norm_factor = jnp.sum(m_attr_mat, axis=0)                               # [B]
    loss_mm = jnp.sum(m_attr_mat * (loss_attr / (norm_factor[None, :] + 1e-8)),
                      axis=0)                                               # [B]
    count = jnp.sum(m_attr_mat)
    acc_mm = jnp.sum(m_attr_mat * corr_attr) / count
    acc_cp = jnp.mean(corr_cp)
    acc_ip = jnp.mean(corr_ip)
    reg_e = jnp.mean(jnp.sqrt(jnp.sum(emb * emb, axis=1)))
    return ([jnp.mean(loss_ip), jnp.mean(loss_cp), jnp.mean(loss_mm)],
            [acc_ip, acc_cp, acc_mm], [reg_e])


def _forward_impl(images, labels, masks, params, prep):
    items, cats, attrs = labels[0], labels[1], labels[2:]
    m_attrs = masks[1:]                  # masks[0] (m_cats) is unused, as in PyTorch
    n_attr = len(m_attrs)

    B = images.shape[0]
    x_flat = images.reshape(B, -1).astype(jnp.float32)
    # condition order: attrs 0..n_attr-1, then cats (cond=n_attr), then items.
    labels_cm = jnp.stack(list(attrs) + [cats, items]).astype(jnp.int32)    # [n_cond, B]

    tb, bp = _tile_batch(B)
    if bp != B:
        x_flat = jnp.pad(x_flat, ((0, bp - B), (0, 0)))
        labels_cm = jnp.pad(labels_cm, ((0, 0), (0, bp - B)))

    emb, loss_all, corr_all = _fused_forward_pallas(x_flat, labels_cm, params, prep, tb)
    emb = emb[:B]
    loss_all = loss_all[:, :B]
    corr_all = corr_all[:, :B]

    m_attr_mat = jnp.stack(m_attrs).astype(jnp.float32)                     # [n_attr, B]
    return _aggregate(loss_all, corr_all, m_attr_mat, emb, n_attr), emb


def proxy_loss_forward(images, labels, masks, params, prep):
    """ProxyLoss.forward (mode='concat'):
    returns ([loss_ip, loss_cp, loss_mm], [acc_ip, acc_cp, acc_mm], [reg_e])."""
    outputs, _ = _forward_impl(images, labels, masks, params, prep)
    return outputs


# ---------------------------------------------------------------- reference -

def _reference_from_emb(emb, labels_mat, m_attr_mat, params, n_attr):
    """Pure-jnp, exact-f32 reference of the loss path (PyTorch formulation)."""
    proxies, cmasks = params["proxies"], params["cond_masks"]
    losses, corrs = [], []
    for c in range(len(proxies)):
        mask = cmasks[c]
        mx = emb * mask[None, :]
        mZ = proxies[c] * mask[None, :]
        dist = jnp.sum((mx[:, None, :] - mZ[None, :, :]) ** 2, axis=2)      # [B, K_c]
        logits = -dist
        lab = labels_mat[c]
        m = jnp.max(logits, axis=1)
        lse = m + jnp.log(jnp.sum(jnp.exp(logits - m[:, None]), axis=1))
        picked = jnp.take_along_axis(logits, lab[:, None], axis=1)[:, 0]
        losses.append(lse - picked)
        corrs.append((jnp.argmin(dist, axis=1) == lab).astype(jnp.float32))
    return _aggregate(jnp.stack(losses), jnp.stack(corrs), m_attr_mat, emb, n_attr)


# ---------------------------------------------------------------- main ------

if __name__ == "__main__":
    B, Cin, H, W = 8, 4, 16, 16
    D = 128
    n_attr = 2
    K_attr, K_cats, K_items = 16, 16, 128
    n_cond = n_attr + 2                         # attrs..., cats, items ('concat')

    key = jax.random.PRNGKey(0)
    keys = jax.random.split(key, 16)

    F = Cin * H * W
    step = D // n_cond                          # disjoint 'concat' subspaces
    cond_masks = jnp.zeros((n_cond, D), jnp.float32)
    for c in range(n_cond):
        cond_masks = cond_masks.at[c, c * step:(c + 1) * step].set(1.0)

    k_sizes = [K_attr] * n_attr + [K_cats, K_items]
    proxies = [0.5 * jax.random.normal(keys[4 + c], (k_sizes[c], D), jnp.float32)
               for c in range(n_cond)]

    params = {
        "emb_w": 0.03 * jax.random.normal(keys[0], (F, D), jnp.float32),
        "emb_b": 0.01 * jax.random.normal(keys[1], (1, D), jnp.float32),
        "proxies": proxies,
        "cond_masks": cond_masks,
    }
    prep = prepare_proxy_params(params)

    images = jax.random.normal(keys[2], (B, Cin, H, W), jnp.float32)
    items = jax.random.randint(keys[3], (B,), 0, K_items)
    cats = jax.random.randint(keys[8], (B,), 0, K_cats)
    attrs = [jax.random.randint(keys[9 + i], (B,), 0, K_attr) for i in range(n_attr)]
    m_cats = jnp.ones((B,), jnp.float32)
    m_attrs = [jax.random.bernoulli(keys[11 + i], 0.7, (B,)).astype(jnp.float32)
               for i in range(n_attr)]
    m_attrs[0] = m_attrs[0].at[0].set(1.0)      # ensure count > 0

    labels = [items, cats] + attrs
    masks = [m_cats] + m_attrs

    fwd = jax.jit(_forward_impl)
    outputs, emb = fwd(images, labels, masks, params, prep)
    outputs = jax.block_until_ready(outputs)
    emb = jax.block_until_ready(emb)

    # 1) fused backbone matmul vs XLA (loose tolerance: default MXU precision)
    emb_ref = images.reshape(B, -1) @ params["emb_w"] + params["emb_b"]
    assert jnp.allclose(emb, emb_ref, rtol=5e-2, atol=5e-2), (
        float(jnp.max(jnp.abs(emb - emb_ref))))

    # 2) fused proxy-CE + aggregation vs exact-f32 reference on the same emb
    labels_mat = jnp.stack(attrs + [cats, items]).astype(jnp.int32)
    m_attr_mat = jnp.stack(m_attrs)
    ref_losses, ref_accs, ref_regs = _reference_from_emb(
        emb, labels_mat, m_attr_mat, params, n_attr)
    losses, accs, regs = outputs
    assert len(losses) == len(ref_losses) == 3
    assert len(accs) == len(ref_accs) == 3
    assert len(regs) == len(ref_regs) == 1

    for a, b in zip(losses, ref_losses):
        # default-precision MXU distance dot -> bf16-level rounding vs f32 reference
        assert jnp.allclose(a, b, rtol=5e-2, atol=5e-2), (float(a), float(b))
    for a, b in zip(accs, ref_accs):
        # accuracies match exactly except for a rare near-tie flipped by MXU
        # rounding; allow at most one sample to flip.
        assert abs(float(a) - float(b)) <= 0.2, (float(a), float(b))
    for a, b in zip(regs, ref_regs):
        assert jnp.allclose(a, b, rtol=1e-4, atol=1e-4), (float(a), float(b))

    print("KERNEL_OK")
</pallas_src>

<mosaic_0001>
module attributes {stable_mosaic.version = 11 : i64} {
  func.func @fused_proxy_loss_kernel(%arg0: i32, %arg1: memref<4x8xi32, #tpu.memory_space<vmem>>, %arg2: memref<8x1024xf32, #tpu.memory_space<vmem>>, %arg3: memref<1024x128xf32, #tpu.memory_space<vmem>>, %arg4: memref<1x128xf32, #tpu.memory_space<vmem>>, %arg5: memref<512x128xf32, #tpu.memory_space<vmem>>, %arg6: memref<512x1xf32, #tpu.memory_space<vmem>>, %arg7: memref<8x128xf32, #tpu.memory_space<vmem>>, %arg8: memref<4x8xf32, #tpu.memory_space<vmem>>, %arg9: memref<4x8xf32, #tpu.memory_space<vmem>>) attributes {dimension_semantics = [#tpu.dimension_semantics<parallel>], iteration_bounds = array<i64: 1>, scalar_prefetch = 0 : i64, scratch_operands = 0 : i64, tpu.core_type = #tpu.core_type<tc>, window_params = [{transform_indices = @transform_0, window_bounds = array<i64: 4, 8>}, {transform_indices = @transform_1, window_bounds = array<i64: 8, 1024>}, {pipeline_mode = #tpu.pipeline_mode<synchronous>, transform_indices = @transform_2, window_bounds = array<i64: 1024, 128>}, {pipeline_mode = #tpu.pipeline_mode<synchronous>, transform_indices = @transform_3, window_bounds = array<i64: 1, 128>}, {pipeline_mode = #tpu.pipeline_mode<synchronous>, transform_indices = @transform_4, window_bounds = array<i64: 512, 128>}, {pipeline_mode = #tpu.pipeline_mode<synchronous>, transform_indices = @transform_5, window_bounds = array<i64: 512, 1>}, {transform_indices = @transform_6, window_bounds = array<i64: 8, 128>}, {transform_indices = @transform_7, window_bounds = array<i64: 4, 8>}, {transform_indices = @transform_8, window_bounds = array<i64: 4, 8>}]} {
    %c0 = arith.constant 0 : index
    %c0_0 = arith.constant 0 : index
    %0 = vector.load %arg2[%c0, %c0_0] : memref<8x1024xf32, #tpu.memory_space<vmem>>, vector<8x1024xf32>
    %c0_1 = arith.constant 0 : index
    %c0_2 = arith.constant 0 : index
    %1 = vector.load %arg3[%c0_1, %c0_2] : memref<1024x128xf32, #tpu.memory_space<vmem>>, vector<1024x128xf32>
    %cst = arith.constant dense<0.000000e+00> : vector<8x128xf32>
    %2 = tpu.matmul %0, %1, %cst {dimension_numbers = #tpu.dot_dimension_numbers<[1], [0], [0], [1], [0, 0, 1, 1], [], []>} : vector<8x1024xf32>, vector<1024x128xf32>, vector<8x128xf32> -> vector<8x128xf32>
    %c0_3 = arith.constant 0 : index
    %c0_4 = arith.constant 0 : index
    %3 = vector.load %arg4[%c0_3, %c0_4] : memref<1x128xf32, #tpu.memory_space<vmem>>, vector<1x128xf32>
    %4 = vector.broadcast %3 : vector<1x128xf32> to vector<8x128xf32>
    %5 = arith.addf %2, %4 : vector<8x128xf32>
    %c0_5 = arith.constant 0 : index
    %c0_6 = arith.constant 0 : index
    %6 = vector.load %arg7[%c0_5, %c0_6] : memref<8x128xf32, #tpu.memory_space<vmem>>, vector<8x128xf32>
    tpu.vector_store %arg7[%c0_5, %c0_6], %5 {strides = array<i32>} : memref<8x128xf32, #tpu.memory_space<vmem>>, vector<8x128xf32>,
    %c0_7 = arith.constant 0 : index
    %c0_8 = arith.constant 0 : index
    %7 = vector.load %arg5[%c0_7, %c0_8] : memref<512x128xf32, #tpu.memory_space<vmem>>, vector<512x128xf32>
    %cst_9 = arith.constant dense<0.000000e+00> : vector<512x8xf32>
    %8 = tpu.matmul %7, %5, %cst_9 {dimension_numbers = #tpu.dot_dimension_numbers<[1], [1], [0], [0], [0, 0, 1, 0], [], []>} : vector<512x128xf32>, vector<8x128xf32>, vector<512x8xf32> -> vector<512x8xf32>
    %cst_10 = arith.constant 2.000000e+00 : f32
    %9 = vector.broadcast %cst_10 : f32 to vector<512x8xf32>
    %10 = arith.mulf %9, %8 : vector<512x8xf32>
    %c0_11 = arith.constant 0 : index
    %c0_12 = arith.constant 0 : index
    %11 = vector.load %arg6[%c0_11, %c0_12] : memref<512x1xf32, #tpu.memory_space<vmem>>, vector<512x1xf32>
    %12 = vector.broadcast %11 : vector<512x1xf32> to vector<512x8xf32>
    %13 = arith.subf %10, %12 : vector<512x8xf32>
    %14 = tpu.iota {dimensions = array<i32: 0>} : vector<128x8xi32>
    %15 = vector.extract_strided_slice %13 {offsets = [0, 0], sizes = [128, 8], strides = [1, 1]} : vector<512x8xf32> to vector<128x8xf32>
    %c0_13 = arith.constant 0 : index
    %c0_14 = arith.constant 0 : index
    %16 = vector.load %arg1[%c0_13, %c0_14] : memref<4x8xi32, #tpu.memory_space<vmem>>, vector<1x8xi32>
    %cst_15 = arith.constant dense<0xFF800000> : vector<8xf32>
    %17 = vector.multi_reduction <maximumf>, %15, %cst_15 [0] : vector<128x8xf32> to vector<8xf32>
    %18 = vector.shape_cast %17 : vector<8xf32> to vector<1x8xf32>
    %19 = vector.broadcast %18 : vector<1x8xf32> to vector<128x8xf32>
    %20 = arith.subf %15, %19 : vector<128x8xf32>
    %21 = math.exp %20 : vector<128x8xf32>
    %cst_16 = arith.constant dense<0.000000e+00> : vector<8xf32>
    %22 = vector.multi_reduction <add>, %21, %cst_16 [0] : vector<128x8xf32> to vector<8xf32>
    %23 = vector.shape_cast %22 : vector<8xf32> to vector<1x8xf32>
    %24 = math.log %23 : vector<1x8xf32>
    %25 = arith.addf %18, %24 : vector<1x8xf32>
    %26 = vector.broadcast %16 : vector<1x8xi32> to vector<128x8xi32>
    %27 = arith.cmpi eq, %14, %26 : vector<128x8xi32>
    %cst_17 = arith.constant 0.000000e+00 : f32
    %28 = vector.broadcast %cst_17 : f32 to vector<128x8xf32>
    %29 = arith.select %27, %15, %28 : vector<128x8xi1>, vector<128x8xf32>
    %cst_18 = arith.constant dense<0.000000e+00> : vector<8xf32>
    %30 = vector.multi_reduction <add>, %29, %cst_18 [0] : vector<128x8xf32> to vector<8xf32>
    %31 = vector.shape_cast %30 : vector<8xf32> to vector<1x8xf32>
    %32 = vector.broadcast %18 : vector<1x8xf32> to vector<128x8xf32>
    %33 = arith.cmpf oge, %15, %32 : vector<128x8xf32>
    %c128_i32 = arith.constant 128 : i32
    %34 = vector.broadcast %c128_i32 : i32 to vector<128x8xi32>
    %35 = arith.select %33, %14, %34 : vector<128x8xi1>, vector<128x8xi32>
    %cst_19 = arith.constant dense<2147483647> : vector<8xi32>
    %36 = vector.multi_reduction <minsi>, %35, %cst_19 [0] : vector<128x8xi32> to vector<8xi32>
    %37 = vector.shape_cast %36 : vector<8xi32> to vector<1x8xi32>
    %38 = arith.subf %25, %31 : vector<1x8xf32>
    %c0_20 = arith.constant 0 : index
    %c0_21 = arith.constant 0 : index
    %39 = vector.load %arg8[%c0_20, %c0_21] : memref<4x8xf32, #tpu.memory_space<vmem>>, vector<1x8xf32>
    tpu.vector_store %arg8[%c0_20, %c0_21], %38 {strides = array<i32>} : memref<4x8xf32, #tpu.memory_space<vmem>>, vector<1x8xf32>,
    %40 = arith.cmpi eq, %37, %16 : vector<1x8xi32>
    %41 = arith.extui %40 : vector<1x8xi1> to vector<1x8xi32>
    %42 = arith.sitofp %41 : vector<1x8xi32> to vector<1x8xf32>
    %c0_22 = arith.constant 0 : index
    %c0_23 = arith.constant 0 : index
    %43 = vector.load %arg9[%c0_22, %c0_23] : memref<4x8xf32, #tpu.memory_space<vmem>>, vector<1x8xf32>
    tpu.vector_store %arg9[%c0_22, %c0_23], %42 {strides = array<i32>} : memref<4x8xf32, #tpu.memory_space<vmem>>, vector<1x8xf32>,
    %44 = vector.extract_strided_slice %13 {offsets = [128, 0], sizes = [128, 8], strides = [1, 1]} : vector<512x8xf32> to vector<128x8xf32>
    %c1 = arith.constant 1 : index
    %c0_24 = arith.constant 0 : index
    %45 = vector.load %arg1[%c1, %c0_24] : memref<4x8xi32, #tpu.memory_space<vmem>>, vector<1x8xi32>
    %cst_25 = arith.constant dense<0xFF800000> : vector<8xf32>
    %46 = vector.multi_reduction <maximumf>, %44, %cst_25 [0] : vector<128x8xf32> to vector<8xf32>
    %47 = vector.shape_cast %46 : vector<8xf32> to vector<1x8xf32>
    %48 = vector.broadcast %47 : vector<1x8xf32> to vector<128x8xf32>
    %49 = arith.subf %44, %48 : vector<128x8xf32>
    %50 = math.exp %49 : vector<128x8xf32>
    %cst_26 = arith.constant dense<0.000000e+00> : vector<8xf32>
    %51 = vector.multi_reduction <add>, %50, %cst_26 [0] : vector<128x8xf32> to vector<8xf32>
    %52 = vector.shape_cast %51 : vector<8xf32> to vector<1x8xf32>
    %53 = math.log %52 : vector<1x8xf32>
    %54 = arith.addf %47, %53 : vector<1x8xf32>
    %55 = vector.broadcast %45 : vector<1x8xi32> to vector<128x8xi32>
    %56 = arith.cmpi eq, %14, %55 : vector<128x8xi32>
    %cst_27 = arith.constant 0.000000e+00 : f32
    %57 = vector.broadcast %cst_27 : f32 to vector<128x8xf32>
    %58 = arith.select %56, %44, %57 : vector<128x8xi1>, vector<128x8xf32>
    %cst_28 = arith.constant dense<0.000000e+00> : vector<8xf32>
    %59 = vector.multi_reduction <add>, %58, %cst_28 [0] : vector<128x8xf32> to vector<8xf32>
    %60 = vector.shape_cast %59 : vector<8xf32> to vector<1x8xf32>
    %61 = vector.broadcast %47 : vector<1x8xf32> to vector<128x8xf32>
    %62 = arith.cmpf oge, %44, %61 : vector<128x8xf32>
    %c128_i32_29 = arith.constant 128 : i32
    %63 = vector.broadcast %c128_i32_29 : i32 to vector<128x8xi32>
    %64 = arith.select %62, %14, %63 : vector<128x8xi1>, vector<128x8xi32>
    %cst_30 = arith.constant dense<2147483647> : vector<8xi32>
    %65 = vector.multi_reduction <minsi>, %64, %cst_30 [0] : vector<128x8xi32> to vector<8xi32>
    %66 = vector.shape_cast %65 : vector<8xi32> to vector<1x8xi32>
    %67 = arith.subf %54, %60 : vector<1x8xf32>
    %c1_31 = arith.constant 1 : index
    %c0_32 = arith.constant 0 : index
    %68 = vector.load %arg8[%c1_31, %c0_32] : memref<4x8xf32, #tpu.memory_space<vmem>>, vector<1x8xf32>
    tpu.vector_store %arg8[%c1_31, %c0_32], %67 {strides = array<i32>} : memref<4x8xf32, #tpu.memory_space<vmem>>, vector<1x8xf32>,
    %69 = arith.cmpi eq, %66, %45 : vector<1x8xi32>
    %70 = arith.extui %69 : vector<1x8xi1> to vector<1x8xi32>
    %71 = arith.sitofp %70 : vector<1x8xi32> to vector<1x8xf32>
    %c1_33 = arith.constant 1 : index
    %c0_34 = arith.constant 0 : index
    %72 = vector.load %arg9[%c1_33, %c0_34] : memref<4x8xf32, #tpu.memory_space<vmem>>, vector<1x8xf32>
    tpu.vector_store %arg9[%c1_33, %c0_34], %71 {strides = array<i32>} : memref<4x8xf32, #tpu.memory_space<vmem>>, vector<1x8xf32>,
    %73 = vector.extract_strided_slice %13 {offsets = [256, 0], sizes = [128, 8], strides = [1, 1]} : vector<512x8xf32> to vector<128x8xf32>
    %c2 = arith.constant 2 : index
    %c0_35 = arith.constant 0 : index
    %74 = vector.load %arg1[%c2, %c0_35] : memref<4x8xi32, #tpu.memory_space<vmem>>, vector<1x8xi32>
    %cst_36 = arith.constant dense<0xFF800000> : vector<8xf32>
    %75 = vector.multi_reduction <maximumf>, %73, %cst_36 [0] : vector<128x8xf32> to vector<8xf32>
    %76 = vector.shape_cast %75 : vector<8xf32> to vector<1x8xf32>
    %77 = vector.broadcast %76 : vector<1x8xf32> to vector<128x8xf32>
    %78 = arith.subf %73, %77 : vector<128x8xf32>
    %79 = math.exp %78 : vector<128x8xf32>
    %cst_37 = arith.constant dense<0.000000e+00> : vector<8xf32>
    %80 = vector.multi_reduction <add>, %79, %cst_37 [0] : vector<128x8xf32> to vector<8xf32>
    %81 = vector.shape_cast %80 : vector<8xf32> to vector<1x8xf32>
    %82 = math.log %81 : vector<1x8xf32>
    %83 = arith.addf %76, %82 : vector<1x8xf32>
    %84 = vector.broadcast %74 : vector<1x8xi32> to vector<128x8xi32>
    %85 = arith.cmpi eq, %14, %84 : vector<128x8xi32>
    %cst_38 = arith.constant 0.000000e+00 : f32
    %86 = vector.broadcast %cst_38 : f32 to vector<128x8xf32>
    %87 = arith.select %85, %73, %86 : vector<128x8xi1>, vector<128x8xf32>
    %cst_39 = arith.constant dense<0.000000e+00> : vector<8xf32>
    %88 = vector.multi_reduction <add>, %87, %cst_39 [0] : vector<128x8xf32> to vector<8xf32>
    %89 = vector.shape_cast %88 : vector<8xf32> to vector<1x8xf32>
    %90 = vector.broadcast %76 : vector<1x8xf32> to vector<128x8xf32>
    %91 = arith.cmpf oge, %73, %90 : vector<128x8xf32>
    %c128_i32_40 = arith.constant 128 : i32
    %92 = vector.broadcast %c128_i32_40 : i32 to vector<128x8xi32>
    %93 = arith.select %91, %14, %92 : vector<128x8xi1>, vector<128x8xi32>
    %cst_41 = arith.constant dense<2147483647> : vector<8xi32>
    %94 = vector.multi_reduction <minsi>, %93, %cst_41 [0] : vector<128x8xi32> to vector<8xi32>
    %95 = vector.shape_cast %94 : vector<8xi32> to vector<1x8xi32>
    %96 = arith.subf %83, %89 : vector<1x8xf32>
    %c2_42 = arith.constant 2 : index
    %c0_43 = arith.constant 0 : index
    %97 = vector.load %arg8[%c2_42, %c0_43] : memref<4x8xf32, #tpu.memory_space<vmem>>, vector<1x8xf32>
    tpu.vector_store %arg8[%c2_42, %c0_43], %96 {strides = array<i32>} : memref<4x8xf32, #tpu.memory_space<vmem>>, vector<1x8xf32>,
    %98 = arith.cmpi eq, %95, %74 : vector<1x8xi32>
    %99 = arith.extui %98 : vector<1x8xi1> to vector<1x8xi32>
    %100 = arith.sitofp %99 : vector<1x8xi32> to vector<1x8xf32>
    %c2_44 = arith.constant 2 : index
    %c0_45 = arith.constant 0 : index
    %101 = vector.load %arg9[%c2_44, %c0_45] : memref<4x8xf32, #tpu.memory_space<vmem>>, vector<1x8xf32>
    tpu.vector_store %arg9[%c2_44, %c0_45], %100 {strides = array<i32>} : memref<4x8xf32, #tpu.memory_space<vmem>>, vector<1x8xf32>,
    %102 = vector.extract_strided_slice %13 {offsets = [384, 0], sizes = [128, 8], strides = [1, 1]} : vector<512x8xf32> to vector<128x8xf32>
    %c3 = arith.constant 3 : index
    %c0_46 = arith.constant 0 : index
    %103 = vector.load %arg1[%c3, %c0_46] : memref<4x8xi32, #tpu.memory_space<vmem>>, vector<1x8xi32>
    %cst_47 = arith.constant dense<0xFF800000> : vector<8xf32>
    %104 = vector.multi_reduction <maximumf>, %102, %cst_47 [0] : vector<128x8xf32> to vector<8xf32>
    %105 = vector.shape_cast %104 : vector<8xf32> to vector<1x8xf32>
    %106 = vector.broadcast %105 : vector<1x8xf32> to vector<128x8xf32>
    %107 = arith.subf %102, %106 : vector<128x8xf32>
    %108 = math.exp %107 : vector<128x8xf32>
    %cst_48 = arith.constant dense<0.000000e+00> : vector<8xf32>
    %109 = vector.multi_reduction <add>, %108, %cst_48 [0] : vector<128x8xf32> to vector<8xf32>
    %110 = vector.shape_cast %109 : vector<8xf32> to vector<1x8xf32>
    %111 = math.log %110 : vector<1x8xf32>
    %112 = arith.addf %105, %111 : vector<1x8xf32>
    %113 = vector.broadcast %103 : vector<1x8xi32> to vector<128x8xi32>
    %114 = arith.cmpi eq, %14, %113 : vector<128x8xi32>
    %cst_49 = arith.constant 0.000000e+00 : f32
    %115 = vector.broadcast %cst_49 : f32 to vector<128x8xf32>
    %116 = arith.select %114, %102, %115 : vector<128x8xi1>, vector<128x8xf32>
    %cst_50 = arith.constant dense<0.000000e+00> : vector<8xf32>
    %117 = vector.multi_reduction <add>, %116, %cst_50 [0] : vector<128x8xf32> to vector<8xf32>
    %118 = vector.shape_cast %117 : vector<8xf32> to vector<1x8xf32>
    %119 = vector.broadcast %105 : vector<1x8xf32> to vector<128x8xf32>
    %120 = arith.cmpf oge, %102, %119 : vector<128x8xf32>
    %c128_i32_51 = arith.constant 128 : i32
    %121 = vector.broadcast %c128_i32_51 : i32 to vector<128x8xi32>
    %122 = arith.select %120, %14, %121 : vector<128x8xi1>, vector<128x8xi32>
    %cst_52 = arith.constant dense<2147483647> : vector<8xi32>
    %123 = vector.multi_reduction <minsi>, %122, %cst_52 [0] : vector<128x8xi32> to vector<8xi32>
    %124 = vector.shape_cast %123 : vector<8xi32> to vector<1x8xi32>
    %125 = arith.subf %112, %118 : vector<1x8xf32>
    %c3_53 = arith.constant 3 : index
    %c0_54 = arith.constant 0 : index
    %126 = vector.load %arg8[%c3_53, %c0_54] : memref<4x8xf32, #tpu.memory_space<vmem>>, vector<1x8xf32>
    tpu.vector_store %arg8[%c3_53, %c0_54], %125 {strides = array<i32>} : memref<4x8xf32, #tpu.memory_space<vmem>>, vector<1x8xf32>,
    %127 = arith.cmpi eq, %124, %103 : vector<1x8xi32>
    %128 = arith.extui %127 : vector<1x8xi1> to vector<1x8xi32>
    %129 = arith.sitofp %128 : vector<1x8xi32> to vector<1x8xf32>
    %c3_55 = arith.constant 3 : index
    %c0_56 = arith.constant 0 : index
    %130 = vector.load %arg9[%c3_55, %c0_56] : memref<4x8xf32, #tpu.memory_space<vmem>>, vector<1x8xf32>
    tpu.vector_store %arg9[%c3_55, %c0_56], %129 {strides = array<i32>} : memref<4x8xf32, #tpu.memory_space<vmem>>, vector<1x8xf32>,
    return
  }
  func.func @transform_0(%arg0: i32) -> (i32, i32) {
    %c0_i32 = arith.constant 0 : i32
    %c0_i32_0 = arith.constant 0 : i32
    return %c0_i32, %arg0 : i32, i32
  }
  func.func @transform_1(%arg0: i32) -> (i32, i32) {
    %c0_i32 = arith.constant 0 : i32
    %c0_i32_0 = arith.constant 0 : i32
    return %arg0, %c0_i32 : i32, i32
  }
  func.func @transform_2(%arg0: i32) -> (i32, i32) {
    %c0_i32 = arith.constant 0 : i32
    %c0_i32_0 = arith.constant 0 : i32
    %c0_i32_1 = arith.constant 0 : i32
    return %c0_i32, %c0_i32_0 : i32, i32
  }
  func.func @transform_3(%arg0: i32) -> (i32, i32) {
    %c0_i32 = arith.constant 0 : i32
    %c0_i32_0 = arith.constant 0 : i32
    %c0_i32_1 = arith.constant 0 : i32
    return %c0_i32, %c0_i32_0 : i32, i32
  }
  func.func @transform_4(%arg0: i32) -> (i32, i32) {
    %c0_i32 = arith.constant 0 : i32
    %c0_i32_0 = arith.constant 0 : i32
    %c0_i32_1 = arith.constant 0 : i32
    return %c0_i32, %c0_i32_0 : i32, i32
  }
  func.func @transform_5(%arg0: i32) -> (i32, i32) {
    %c0_i32 = arith.constant 0 : i32
    %c0_i32_0 = arith.constant 0 : i32
    %c0_i32_1 = arith.constant 0 : i32
    return %c0_i32, %c0_i32_0 : i32, i32
  }
  func.func @transform_6(%arg0: i32) -> (i32, i32) {
    %c0_i32 = arith.constant 0 : i32
    %c0_i32_0 = arith.constant 0 : i32
    return %arg0, %c0_i32 : i32, i32
  }
  func.func @transform_7(%arg0: i32) -> (i32, i32) {
    %c0_i32 = arith.constant 0 : i32
    %c0_i32_0 = arith.constant 0 : i32
    return %c0_i32, %arg0 : i32, i32
  }
  func.func @transform_8(%arg0: i32) -> (i32, i32) {
    %c0_i32 = arith.constant 0 : i32
    %c0_i32_0 = arith.constant 0 : i32
    return %c0_i32, %arg0 : i32, i32
  }
}

</mosaic_0001>

<llo_original>
// kernel: _forward_impl.1
$region0: #{_forward_impl.1}
  #allocation0 [shape = 'u32[]', space=smem, size = 0x4, offset = 0x4, fixed_abs, tag = 'smem constant byte address 0x4 - core index']
  #allocation1 [shape = 'u32[144,128]{1,0:T(1,128)}', space=vmem, size = 0x12000, scoped, tag = 'internal scratch']
  %s0 = inlined_call_operand.vmem [shape: s32[4,8], index: 0, kind: input, shape index: {}]
  %s1 = inlined_call_operand.vmem [shape: f32[8,1024], index: 1, kind: input, shape index: {}]
  %s2 = inlined_call_operand.vmem [shape: f32[1024,128], index: 2, kind: input, shape index: {}]
  %s3 = inlined_call_operand.vmem [shape: f32[1,128], index: 3, kind: input, shape index: {}]
  %s4 = inlined_call_operand.hbm [shape: f32[512,128], index: 4, kind: input, shape index: {}]
  %s5 = inlined_call_operand.vmem [shape: f32[512,1], index: 5, kind: input, shape index: {}]
  %s6 = inlined_call_operand.vmem [shape: f32[8,128], index: 6, kind: output, shape index: {0}]
  %s7 = inlined_call_operand.vmem [shape: f32[4,8], index: 7, kind: output, shape index: {1}]
  %s8 = inlined_call_operand.vmem [shape: f32[4,8], index: 8, kind: output, shape index: {2}]
  %9 = xla_tuple %s6, %s7, %s8
  %s10 = sld [smem:[#allocation0]]
  $region54: #{_forward_impl.1} parent=0
    _
  %s12 = ssub.s32 1, %s10
  %s13 = scalar_select 0, %s12, %s10
  $region1: #{_forward_impl.1} parent=0
    #allocation2 [shape = 'u8[262144]{0}', space=vmem, size = 0x40000, scoped, tag = 'input window, operand 4, single buffered']
    #allocation3 [shape = 's32[1]{0}', space=sflag, size = 0x4, scoped, tag = 'scoped memory for _forward_impl.1']
    %14 = vsyncpa [#allocation3], 0
    // Predicated region
    $region2: #{_forward_impl.1} parent=1 // pred_check
      _
    $region3: #{_forward_impl.1} parent=1 // pred_check_branch
      %16 = sbr.rel (0) target = $region5
    $region4: #{_forward_impl.1} parent=1 // pred_region
      _
    $region5: #{_forward_impl.1} parent=1 // pred_fallthru
      _
    // Predicated region
    $region6: #{_forward_impl.1} parent=1 // pred_check
      _
    $region7: #{_forward_impl.1} parent=1 // pred_check_branch
      %18 = sbr.rel (0) target = $region9
    $region8: #{_forward_impl.1} parent=1 // pred_region
      _
    $region9: #{_forward_impl.1} parent=1 // pred_fallthru
      _
    // Predicated region
    $region10: #{_forward_impl.1} parent=1 // pred_check
      _
    $region11: #{_forward_impl.1} parent=1 // pred_check_branch
      %20 = sbr.rel (0) target = $region13
    $region12: #{_forward_impl.1} parent=1 // pred_region
      _
    $region13: #{_forward_impl.1} parent=1 // pred_fallthru
      _
    // Predicated region
    $region14: #{_forward_impl.1} parent=1 // pred_check
      _
    $region15: #{_forward_impl.1} parent=1 // pred_check_branch
      %22 = sbr.rel (0) target = $region17
    $region16: #{_forward_impl.1} parent=1 // pred_region
      _
    $region17: #{_forward_impl.1} parent=1 // pred_fallthru
      _
    // Predicated region
    $region18: #{_forward_impl.1} parent=1 // pred_check
      _
    $region19: #{_forward_impl.1} parent=1 // pred_check_branch
      %24 = sbr.rel (0) target = $region21
    $region20: #{_forward_impl.1} parent=1 // pred_region
      %s26 = ssub.s32 8192, 8192
      %27 = vsyncadd [#allocation3], %s26
      %s28 = sshll.u32 [#allocation2], 4
      %s29 = int_to_ptr.vmem [resolvable:$true] %s28
      %34 = dma.hbm_to_vmem [thread:$0]  %s4, 8192, %s29, [#allocation3], 128, 128, 8
    $region21: #{_forward_impl.1} parent=1 // pred_fallthru
      _
    // Predicated region
    $region22: #{_forward_impl.1} parent=1 // pred_check
      _
    $region23: #{_forward_impl.1} parent=1 // pred_check_branch
      %36 = sbr.rel (0) target = $region25
    $region24: #{_forward_impl.1} parent=1 // pred_region
      _
    $region25: #{_forward_impl.1} parent=1 // pred_fallthru
      _
    // Predicated region
    $region26: #{_forward_impl.1} parent=1 // pred_check
      _
    $region27: #{_forward_impl.1} parent=1 // pred_check_branch
      %38 = sbr.rel (0) target = $region29
    $region28: #{_forward_impl.1} parent=1 // pred_region
      %39 = dma.done [#allocation3], 8192
    $region29: #{_forward_impl.1} parent=1 // pred_fallthru
      _
    %v40 = vld [vmem:[%s1] sm:$0xff]
    %v41 = vld [vmem:[%s1 + $0x8] sm:$0xff]
    %v42 = vld [vmem:[%s1 + $0x10] sm:$0xff]
    %v43 = vld [vmem:[%s1 + $0x18] sm:$0xff]
    %v44 = vld [vmem:[%s1 + $0x20] sm:$0xff]
    %v45 = vld [vmem:[%s1 + $0x28] sm:$0xff]
    %v46 = vld [vmem:[%s1 + $0x30] sm:$0xff]
    %v47 = vld [vmem:[%s1 + $0x38] sm:$0xff]
    %v48 = vld [vmem:[%s2] sm:$0xff]
    %v49 = vld [vmem:[%s2 + $0x8] sm:$0xff]
    %v50 = vld [vmem:[%s2 + $0x10] sm:$0xff]
    %v51 = vld [vmem:[%s2 + $0x18] sm:$0xff]
    %v52 = vld [vmem:[%s2 + $0x20] sm:$0xff]
    %v53 = vld [vmem:[%s2 + $0x28] sm:$0xff]
    %v54 = vld [vmem:[%s2 + $0x30] sm:$0xff]
    %v55 = vld [vmem:[%s2 + $0x38] sm:$0xff]
    %v56 = vld [vmem:[%s2 + $0x40] sm:$0xff]
    %v57 = vld [vmem:[%s2 + $0x48] sm:$0xff]
    %v58 = vld [vmem:[%s2 + $0x50] sm:$0xff]
    %v59 = vld [vmem:[%s2 + $0x58] sm:$0xff]
    %v60 = vld [vmem:[%s2 + $0x60] sm:$0xff]
    %v61 = vld [vmem:[%s2 + $0x68] sm:$0xff]
    %v62 = vld [vmem:[%s2 + $0x70] sm:$0xff]
    %v63 = vld [vmem:[%s2 + $0x78] sm:$0xff]
    %v64 = vld [vmem:[%s2 + $0x80] sm:$0xff]
    %v65 = vld [vmem:[%s2 + $0x88] sm:$0xff]
    %v66 = vld [vmem:[%s2 + $0x90] sm:$0xff]
    %v67 = vld [vmem:[%s2 + $0x98] sm:$0xff]
    %v68 = vld [vmem:[%s2 + $0xa0] sm:$0xff]
    %v69 = vld [vmem:[%s2 + $0xa8] sm:$0xff]
    %v70 = vld [vmem:[%s2 + $0xb0] sm:$0xff]
    %v71 = vld [vmem:[%s2 + $0xb8] sm:$0xff]
    %v72 = vld [vmem:[%s2 + $0xc0] sm:$0xff]
    %v73 = vld [vmem:[%s2 + $0xc8] sm:$0xff]
    %v74 = vld [vmem:[%s2 + $0xd0] sm:$0xff]
    %v75 = vld [vmem:[%s2 + $0xd8] sm:$0xff]
    %v76 = vld [vmem:[%s2 + $0xe0] sm:$0xff]
    %v77 = vld [vmem:[%s2 + $0xe8] sm:$0xff]
    %v78 = vld [vmem:[%s2 + $0xf0] sm:$0xff]
    %v79 = vld [vmem:[%s2 + $0xf8] sm:$0xff]
    %v80 = vld [vmem:[%s2 + $0x100] sm:$0xff]
    %v81 = vld [vmem:[%s2 + $0x108] sm:$0xff]
    %v82 = vld [vmem:[%s2 + $0x110] sm:$0xff]
    %v83 = vld [vmem:[%s2 + $0x118] sm:$0xff]
    %v84 = vld [vmem:[%s2 + $0x120] sm:$0xff]
    %v85 = vld [vmem:[%s2 + $0x128] sm:$0xff]
    %v86 = vld [vmem:[%s2 + $0x130] sm:$0xff]
    %v87 = vld [vmem:[%s2 + $0x138] sm:$0xff]
    %v88 = vld [vmem:[%s2 + $0x140] sm:$0xff]
    %v89 = vld [vmem:[%s2 + $0x148] sm:$0xff]
    %v90 = vld [vmem:[%s2 + $0x150] sm:$0xff]
    %v91 = vld [vmem:[%s2 + $0x158] sm:$0xff]
    %v92 = vld [vmem:[%s2 + $0x160] sm:$0xff]
    %v93 = vld [vmem:[%s2 + $0x168] sm:$0xff]
    %v94 = vld [vmem:[%s2 + $0x170] sm:$0xff]
    %v95 = vld [vmem:[%s2 + $0x178] sm:$0xff]
    %v96 = vld [vmem:[%s2 + $0x180] sm:$0xff]
    %v97 = vld [vmem:[%s2 + $0x188] sm:$0xff]
    %v98 = vld [vmem:[%s2 + $0x190] sm:$0xff]
    %v99 = vld [vmem:[%s2 + $0x198] sm:$0xff]
    %v100 = vld [vmem:[%s2 + $0x1a0] sm:$0xff]
    %v101 = vld [vmem:[%s2 + $0x1a8] sm:$0xff]
    %v102 = vld [vmem:[%s2 + $0x1b0] sm:$0xff]
    %v103 = vld [vmem:[%s2 + $0x1b8] sm:$0xff]
    %v104 = vld [vmem:[%s2 + $0x1c0] sm:$0xff]
    %v105 = vld [vmem:[%s2 + $0x1c8] sm:$0xff]
    %v106 = vld [vmem:[%s2 + $0x1d0] sm:$0xff]
    %v107 = vld [vmem:[%s2 + $0x1d8] sm:$0xff]
    %v108 = vld [vmem:[%s2 + $0x1e0] sm:$0xff]
    %v109 = vld [vmem:[%s2 + $0x1e8] sm:$0xff]
    %v110 = vld [vmem:[%s2 + $0x1f0] sm:$0xff]
    %v111 = vld [vmem:[%s2 + $0x1f8] sm:$0xff]
    %v112 = vld [vmem:[%s2 + $0x200] sm:$0xff]
    %v113 = vld [vmem:[%s2 + $0x208] sm:$0xff]
    %v114 = vld [vmem:[%s2 + $0x210] sm:$0xff]
    %v115 = vld [vmem:[%s2 + $0x218] sm:$0xff]
    %v116 = vld [vmem:[%s2 + $0x220] sm:$0xff]
    %v117 = vld [vmem:[%s2 + $0x228] sm:$0xff]
    %v118 = vld [vmem:[%s2 + $0x230] sm:$0xff]
    %v119 = vld [vmem:[%s2 + $0x238] sm:$0xff]
    %v120 = vld [vmem:[%s2 + $0x240] sm:$0xff]
    %v121 = vld [vmem:[%s2 + $0x248] sm:$0xff]
    %v122 = vld [vmem:[%s2 + $0x250] sm:$0xff]
    %v123 = vld [vmem:[%s2 + $0x258] sm:$0xff]
    %v124 = vld [vmem:[%s2 + $0x260] sm:$0xff]
    %v125 = vld [vmem:[%s2 + $0x268] sm:$0xff]
    %v126 = vld [vmem:[%s2 + $0x270] sm:$0xff]
    %v127 = vld [vmem:[%s2 + $0x278] sm:$0xff]
    %v128 = vld [vmem:[%s2 + $0x280] sm:$0xff]
    %v129 = vld [vmem:[%s2 + $0x288] sm:$0xff]
    %v130 = vld [vmem:[%s2 + $0x290] sm:$0xff]
    %v131 = vld [vmem:[%s2 + $0x298] sm:$0xff]
    %v132 = vld [vmem:[%s2 + $0x2a0] sm:$0xff]
    %v133 = vld [vmem:[%s2 + $0x2a8] sm:$0xff]
    %v134 = vld [vmem:[%s2 + $0x2b0] sm:$0xff]
    %v135 = vld [vmem:[%s2 + $0x2b8] sm:$0xff]
    %v136 = vld [vmem:[%s2 + $0x2c0] sm:$0xff]
    %v137 = vld [vmem:[%s2 + $0x2c8] sm:$0xff]
    %v138 = vld [vmem:[%s2 + $0x2d0] sm:$0xff]
    %v139 = vld [vmem:[%s2 + $0x2d8] sm:$0xff]
    %v140 = vld [vmem:[%s2 + $0x2e0] sm:$0xff]
    %v141 = vld [vmem:[%s2 + $0x2e8] sm:$0xff]
    %v142 = vld [vmem:[%s2 + $0x2f0] sm:$0xff]
    %v143 = vld [vmem:[%s2 + $0x2f8] sm:$0xff]
    %v144 = vld [vmem:[%s2 + $0x300] sm:$0xff]
    %v145 = vld [vmem:[%s2 + $0x308] sm:$0xff]
    %v146 = vld [vmem:[%s2 + $0x310] sm:$0xff]
    %v147 = vld [vmem:[%s2 + $0x318] sm:$0xff]
    %v148 = vld [vmem:[%s2 + $0x320] sm:$0xff]
    %v149 = vld [vmem:[%s2 + $0x328] sm:$0xff]
    %v150 = vld [vmem:[%s2 + $0x330] sm:$0xff]
    %v151 = vld [vmem:[%s2 + $0x338] sm:$0xff]
    %v152 = vld [vmem:[%s2 + $0x340] sm:$0xff]
    %v153 = vld [vmem:[%s2 + $0x348] sm:$0xff]
    %v154 = vld [vmem:[%s2 + $0x350] sm:$0xff]
    %v155 = vld [vmem:[%s2 + $0x358] sm:$0xff]
    %v156 = vld [vmem:[%s2 + $0x360] sm:$0xff]
    %v157 = vld [vmem:[%s2 + $0x368] sm:$0xff]
    %v158 = vld [vmem:[%s2 + $0x370] sm:$0xff]
    %v159 = vld [vmem:[%s2 + $0x378] sm:$0xff]
    %v160 = vld [vmem:[%s2 + $0x380] sm:$0xff]
    %v161 = vld [vmem:[%s2 + $0x388] sm:$0xff]
    %v162 = vld [vmem:[%s2 + $0x390] sm:$0xff]
    %v163 = vld [vmem:[%s2 + $0x398] sm:$0xff]
    %v164 = vld [vmem:[%s2 + $0x3a0] sm:$0xff]
    %v165 = vld [vmem:[%s2 + $0x3a8] sm:$0xff]
    %v166 = vld [vmem:[%s2 + $0x3b0] sm:$0xff]
    %v167 = vld [vmem:[%s2 + $0x3b8] sm:$0xff]
    %v168 = vld [vmem:[%s2 + $0x3c0] sm:$0xff]
    %v169 = vld [vmem:[%s2 + $0x3c8] sm:$0xff]
    %v170 = vld [vmem:[%s2 + $0x3d0] sm:$0xff]
    %v171 = vld [vmem:[%s2 + $0x3d8] sm:$0xff]
    %v172 = vld [vmem:[%s2 + $0x3e0] sm:$0xff]
    %v173 = vld [vmem:[%s2 + $0x3e8] sm:$0xff]
    %v174 = vld [vmem:[%s2 + $0x3f0] sm:$0xff]
    %v175 = vld [vmem:[%s2 + $0x3f8] sm:$0xff]
    %v176 = vld [vmem:[%s3] sm:$0x1]
    %v178 = vlaneseq
    %v179 = vshrl.u32 %v178, 7
    %v180 = vsub.s32 0, %v179
    %v181 = vrot.slane %v176, %v180
    %183 = vmatprep.subr.mxu0 0.0
    %184 = vmatpush1.msra.mxu0 %v63
    %185 = vmatprep.subr.mxu0 0.0
    %186 = vmatpush1.msra.mxu0 %v62
    %187 = vmatprep.subr.mxu0 0.0
    %188 = vmatpush1.msra.mxu0 %v61
    %189 = vmatprep.subr.mxu0 0.0
    %190 = vmatpush1.msra.mxu0 %v60
    %191 = vmatprep.subr.mxu0 0.0
    %192 = vmatpush1.msra.mxu0 %v59
    %193 = vmatprep.subr.mxu0 0.0
    %194 = vmatpush1.msra.mxu0 %v58
    %195 = vmatprep.subr.mxu0 0.0
    %196 = vmatpush1.msra.mxu0 %v57
    %197 = vmatprep.subr.mxu0 0.0
    %198 = vmatpush1.msra.mxu0 %v56
    %199 = vmatprep.subr.mxu0 0.0
    %200 = vmatpush1.msra.mxu0 %v55
    %201 = vmatprep.subr.mxu0 0.0
    %202 = vmatpush1.msra.mxu0 %v54
    %203 = vmatprep.subr.mxu0 0.0
    %204 = vmatpush1.msra.mxu0 %v53
    %205 = vmatprep.subr.mxu0 0.0
    %206 = vmatpush1.msra.mxu0 %v52
    %207 = vmatprep.subr.mxu0 0.0
    %208 = vmatpush1.msra.mxu0 %v51
    %209 = vmatprep.subr.mxu0 0.0
    %210 = vmatpush1.msra.mxu0 %v50
    %211 = vmatprep.subr.mxu0 0.0
    %212 = vmatpush1.msra.mxu0 %v49
    %213 = vmatprep.subr.mxu0 0.0
    %214 = vmatpush1.msra.mxu0 %v48
    %215 = vmatprep.subr.mxu0 0.0
    %216 = vmatpush2.msra.mxu0 %v79
    %217 = vmatprep.subr.mxu0 0.0
    %218 = vmatpush2.msra.mxu0 %v78
    %219 = vmatprep.subr.mxu0 0.0
    %220 = vmatpush2.msra.mxu0 %v77
    %221 = vmatprep.subr.mxu0 0.0
    %222 = vmatpush2.msra.mxu0 %v76
    %223 = vmatprep.subr.mxu0 0.0
    %224 = vmatpush2.msra.mxu0 %v75
    %225 = vmatprep.subr.mxu0 0.0
    %226 = vmatpush2.msra.mxu0 %v74
    %227 = vmatprep.subr.mxu0 0.0
    %228 = vmatpush2.msra.mxu0 %v73
    %229 = vmatprep.subr.mxu0 0.0
    %230 = vmatpush2.msra.mxu0 %v72
    %231 = vmatprep.subr.mxu0 0.0
    %232 = vmatpush2.msra.mxu0 %v71
    %233 = vmatprep.subr.mxu0 0.0
    %234 = vmatpush2.msra.mxu0 %v70
    %235 = vmatprep.subr.mxu0 0.0
    %236 = vmatpush2.msra.mxu0 %v69
    %237 = vmatprep.subr.mxu0 0.0
    %238 = vmatpush2.msra.mxu0 %v68
    %239 = vmatprep.subr.mxu0 0.0
    %240 = vmatpush2.msra.mxu0 %v67
    %241 = vmatprep.subr.mxu0 0.0
    %242 = vmatpush2.msra.mxu0 %v66
    %243 = vmatprep.subr.mxu0 0.0
    %244 = vmatpush2.msra.mxu0 %v65
    %245 = vmatprep.subr.mxu0 0.0
    %246 = vmatpush2.msra.mxu0 %v64
    %247 = vmatprep.mubr.f32.mxu0 %v41
    %248 = vmatmul.mubr.f32.gmra.mxu0 %v40
    %v249 = vpop.f32.mrf.mxu0
    %v250 = vadd.f32 %v181, %v249
    %v251 = vpop.f32.mrf.mxu0
    %252 = vdwg.mxu0
    %253 = vmatprep.subr.mxu0 0.0
    %254 = vmatpush1.msra.mxu0 %v95
    %255 = vmatprep.subr.mxu0 0.0
    %256 = vmatpush1.msra.mxu0 %v94
    %257 = vmatprep.subr.mxu0 0.0
    %258 = vmatpush1.msra.mxu0 %v93
    %259 = vmatprep.subr.mxu0 0.0
    %260 = vmatpush1.msra.mxu0 %v92
    %261 = vmatprep.subr.mxu0 0.0
    %262 = vmatpush1.msra.mxu0 %v91
    %263 = vmatprep.subr.mxu0 0.0
    %264 = vmatpush1.msra.mxu0 %v90
    %265 = vmatprep.subr.mxu0 0.0
    %266 = vmatpush1.msra.mxu0 %v89
    %267 = vmatprep.subr.mxu0 0.0
    %268 = vmatpush1.msra.mxu0 %v88
    %269 = vmatprep.subr.mxu0 0.0
    %270 = vmatpush1.msra.mxu0 %v87
    %271 = vmatprep.subr.mxu0 0.0
    %272 = vmatpush1.msra.mxu0 %v86
    %273 = vmatprep.subr.mxu0 0.0
    %274 = vmatpush1.msra.mxu0 %v85
    %275 = vmatprep.subr.mxu0 0.0
    %276 = vmatpush1.msra.mxu0 %v84
    %277 = vmatprep.subr.mxu0 0.0
    %278 = vmatpush1.msra.mxu0 %v83
    %279 = vmatprep.subr.mxu0 0.0
    %280 = vmatpush1.msra.mxu0 %v82
    %281 = vmatprep.subr.mxu0 0.0
    %282 = vmatpush1.msra.mxu0 %v81
    %283 = vmatprep.subr.mxu0 0.0
    %284 = vmatpush1.msra.mxu0 %v80
    %285 = vmatprep.subr.mxu0 0.0
    %286 = vmatpush2.msra.mxu0 %v111
    %287 = vmatprep.subr.mxu0 0.0
    %288 = vmatpush2.msra.mxu0 %v110
    %289 = vmatprep.subr.mxu0 0.0
    %290 = vmatpush2.msra.mxu0 %v109
    %291 = vmatprep.subr.mxu0 0.0
    %292 = vmatpush2.msra.mxu0 %v108
    %293 = vmatprep.subr.mxu0 0.0
    %294 = vmatpush2.msra.mxu0 %v107
    %295 = vmatprep.subr.mxu0 0.0
    %296 = vmatpush2.msra.mxu0 %v106
    %297 = vmatprep.subr.mxu0 0.0
    %298 = vmatpush2.msra.mxu0 %v105
    %299 = vmatprep.subr.mxu0 0.0
    %300 = vmatpush2.msra.mxu0 %v104
    %301 = vmatprep.subr.mxu0 0.0
    %302 = vmatpush2.msra.mxu0 %v103
    %303 = vmatprep.subr.mxu0 0.0
    %304 = vmatpush2.msra.mxu0 %v102
    %305 = vmatprep.subr.mxu0 0.0
    %306 = vmatpush2.msra.mxu0 %v101
    %307 = vmatprep.subr.mxu0 0.0
    %308 = vmatpush2.msra.mxu0 %v100
    %309 = vmatprep.subr.mxu0 0.0
    %310 = vmatpush2.msra.mxu0 %v99
    %311 = vmatprep.subr.mxu0 0.0
    %312 = vmatpush2.msra.mxu0 %v98
    %313 = vmatprep.subr.mxu0 0.0
    %314 = vmatpush2.msra.mxu0 %v97
    %315 = vmatprep.subr.mxu0 0.0
    %316 = vmatpush2.msra.mxu0 %v96
    %317 = vmatprep.mubr.f32.mxu0 %v43
    %318 = vmatmul.mubr.f32.gmra.mxu0 %v42
    %v319 = vpop.f32.mrf.mxu0
    %v320 = vadd.f32 %v250, %v319
    %v321 = vpop.f32.mrf.mxu0
    %322 = vdwg.mxu0
    %323 = vmatprep.subr.mxu0 0.0
    %324 = vmatpush1.msra.mxu0 %v127
    %325 = vmatprep.subr.mxu0 0.0
    %326 = vmatpush1.msra.mxu0 %v126
    %327 = vmatprep.subr.mxu0 0.0
    %328 = vmatpush1.msra.mxu0 %v125
    %329 = vmatprep.subr.mxu0 0.0
    %330 = vmatpush1.msra.mxu0 %v124
    %331 = vmatprep.subr.mxu0 0.0
    %332 = vmatpush1.msra.mxu0 %v123
    %333 = vmatprep.subr.mxu0 0.0
    %334 = vmatpush1.msra.mxu0 %v122
    %335 = vmatprep.subr.mxu0 0.0
    %336 = vmatpush1.msra.mxu0 %v121
    %337 = vmatprep.subr.mxu0 0.0
    %338 = vmatpush1.msra.mxu0 %v120
    %339 = vmatprep.subr.mxu0 0.0
    %340 = vmatpush1.msra.mxu0 %v119
    %341 = vmatprep.subr.mxu0 0.0
    %342 = vmatpush1.msra.mxu0 %v118
    %343 = vmatprep.subr.mxu0 0.0
    %344 = vmatpush1.msra.mxu0 %v117
    %345 = vmatprep.subr.mxu0 0.0
    %346 = vmatpush1.msra.mxu0 %v116
    %347 = vmatprep.subr.mxu0 0.0
    %348 = vmatpush1.msra.mxu0 %v115
    %349 = vmatprep.subr.mxu0 0.0
    %350 = vmatpush1.msra.mxu0 %v114
    %351 = vmatprep.subr.mxu0 0.0
    %352 = vmatpush1.msra.mxu0 %v113
    %353 = vmatprep.subr.mxu0 0.0
    %354 = vmatpush1.msra.mxu0 %v112
    %355 = vmatprep.subr.mxu0 0.0
    %356 = vmatpush2.msra.mxu0 %v143
    %357 = vmatprep.subr.mxu0 0.0
    %358 = vmatpush2.msra.mxu0 %v142
    %359 = vmatprep.subr.mxu0 0.0
    %360 = vmatpush2.msra.mxu0 %v141
    %361 = vmatprep.subr.mxu0 0.0
    %362 = vmatpush2.msra.mxu0 %v140
    %363 = vmatprep.subr.mxu0 0.0
    %364 = vmatpush2.msra.mxu0 %v139
    %365 = vmatprep.subr.mxu0 0.0
    %366 = vmatpush2.msra.mxu0 %v138
    %367 = vmatprep.subr.mxu0 0.0
    %368 = vmatpush2.msra.mxu0 %v137
    %369 = vmatprep.subr.mxu0 0.0
    %370 = vmatpush2.msra.mxu0 %v136
    %371 = vmatprep.subr.mxu0 0.0
    %372 = vmatpush2.msra.mxu0 %v135
    %373 = vmatprep.subr.mxu0 0.0
    %374 = vmatpush2.msra.mxu0 %v134
    %375 = vmatprep.subr.mxu0 0.0
    %376 = vmatpush2.msra.mxu0 %v133
    %377 = vmatprep.subr.mxu0 0.0
    %378 = vmatpush2.msra.mxu0 %v132
    %379 = vmatprep.subr.mxu0 0.0
    %380 = vmatpush2.msra.mxu0 %v131
    %381 = vmatprep.subr.mxu0 0.0
    %382 = vmatpush2.msra.mxu0 %v130
    %383 = vmatprep.subr.mxu0 0.0
    %384 = vmatpush2.msra.mxu0 %v129
    %385 = vmatprep.subr.mxu0 0.0
    %386 = vmatpush2.msra.mxu0 %v128
    %387 = vmatprep.mubr.f32.mxu0 %v45
    %388 = vmatmul.mubr.f32.gmra.mxu0 %v44
    %v389 = vpop.f32.mrf.mxu0
    %v390 = vadd.f32 %v320, %v389
    %v391 = vpop.f32.mrf.mxu0
    %392 = vdwg.mxu0
    %393 = vmatprep.subr.mxu0 0.0
    %394 = vmatpush1.msra.mxu0 %v159
    %395 = vmatprep.subr.mxu0 0.0
    %396 = vmatpush1.msra.mxu0 %v158
    %397 = vmatprep.subr.mxu0 0.0
    %398 = vmatpush1.msra.mxu0 %v157
    %399 = vmatprep.subr.mxu0 0.0
    %400 = vmatpush1.msra.mxu0 %v156
    %401 = vmatprep.subr.mxu0 0.0
    %402 = vmatpush1.msra.mxu0 %v155
    %403 = vmatprep.subr.mxu0 0.0
    %404 = vmatpush1.msra.mxu0 %v154
    %405 = vmatprep.subr.mxu0 0.0
    %406 = vmatpush1.msra.mxu0 %v153
    %407 = vmatprep.subr.mxu0 0.0
    %408 = vmatpush1.msra.mxu0 %v152
    %409 = vmatprep.subr.mxu0 0.0
    %410 = vmatpush1.msra.mxu0 %v151
    %411 = vmatprep.subr.mxu0 0.0
    %412 = vmatpush1.msra.mxu0 %v150
    %413 = vmatprep.subr.mxu0 0.0
    %414 = vmatpush1.msra.mxu0 %v149
    %415 = vmatprep.subr.mxu0 0.0
    %416 = vmatpush1.msra.mxu0 %v148
    %417 = vmatprep.subr.mxu0 0.0
    %418 = vmatpush1.msra.mxu0 %v147
    %419 = vmatprep.subr.mxu0 0.0
    %420 = vmatpush1.msra.mxu0 %v146
    %421 = vmatprep.subr.mxu0 0.0
    %422 = vmatpush1.msra.mxu0 %v145
    %423 = vmatprep.subr.mxu0 0.0
    %424 = vmatpush1.msra.mxu0 %v144
    %425 = vmatprep.subr.mxu0 0.0
    %426 = vmatpush2.msra.mxu0 %v175
    %427 = vmatprep.subr.mxu0 0.0
    %428 = vmatpush2.msra.mxu0 %v174
    %429 = vmatprep.subr.mxu0 0.0
    %430 = vmatpush2.msra.mxu0 %v173
    %431 = vmatprep.subr.mxu0 0.0
    %432 = vmatpush2.msra.mxu0 %v172
    %433 = vmatprep.subr.mxu0 0.0
    %434 = vmatpush2.msra.mxu0 %v171
    %435 = vmatprep.subr.mxu0 0.0
    %436 = vmatpush2.msra.mxu0 %v170
    %437 = vmatprep.subr.mxu0 0.0
    %438 = vmatpush2.msra.mxu0 %v169
    %439 = vmatprep.subr.mxu0 0.0
    %440 = vmatpush2.msra.mxu0 %v168
    %441 = vmatprep.subr.mxu0 0.0
    %442 = vmatpush2.msra.mxu0 %v167
    %443 = vmatprep.subr.mxu0 0.0
    %444 = vmatpush2.msra.mxu0 %v166
    %445 = vmatprep.subr.mxu0 0.0
    %446 = vmatpush2.msra.mxu0 %v165
    %447 = vmatprep.subr.mxu0 0.0
    %448 = vmatpush2.msra.mxu0 %v164
    %449 = vmatprep.subr.mxu0 0.0
    %450 = vmatpush2.msra.mxu0 %v163
    %451 = vmatprep.subr.mxu0 0.0
    %452 = vmatpush2.msra.mxu0 %v162
    %453 = vmatprep.subr.mxu0 0.0
    %454 = vmatpush2.msra.mxu0 %v161
    %455 = vmatprep.subr.mxu0 0.0
    %456 = vmatpush2.msra.mxu0 %v160
    %457 = vmatprep.mubr.f32.mxu0 %v47
    %458 = vmatmul.mubr.f32.gmra.mxu0 %v46
    %v459 = vpop.f32.mrf.mxu0
    %v460 = vadd.f32 %v390, %v459
    %v461 = vpop.f32.mrf.mxu0
    %462 = vdwg.mxu0
    %463 = vst [vmem:[%s6] sm:$0xff] %v460
    %v464 = vld [vmem:[#allocation2] sm:$0xff]
    %v465 = vld [vmem:[#allocation2 + $0x8] sm:$0xff]
    %v466 = vld [vmem:[#allocation2 + $0x10] sm:$0xff]
    %v467 = vld [vmem:[#allocation2 + $0x18] sm:$0xff]
    %v468 = vld [vmem:[#allocation2 + $0x20] sm:$0xff]
    %v469 = vld [vmem:[#allocation2 + $0x28] sm:$0xff]
    %v470 = vld [vmem:[#allocation2 + $0x30] sm:$0xff]
    %v471 = vld [vmem:[#allocation2 + $0x38] sm:$0xff]
    %v472 = vld [vmem:[#allocation2 + $0x40] sm:$0xff]
    %v473 = vld [vmem:[#allocation2 + $0x48] sm:$0xff]
    %v474 = vld [vmem:[#allocation2 + $0x50] sm:$0xff]
    %v475 = vld [vmem:[#allocation2 + $0x58] sm:$0xff]
    %v476 = vld [vmem:[#allocation2 + $0x60] sm:$0xff]
    %v477 = vld [vmem:[#allocation2 + $0x68] sm:$0xff]
    %v478 = vld [vmem:[#allocation2 + $0x70] sm:$0xff]
    %v479 = vld [vmem:[#allocation2 + $0x78] sm:$0xff]
    %v480 = vld [vmem:[#allocation2 + $0x80] sm:$0xff]
    %v481 = vld [vmem:[#allocation2 + $0x88] sm:$0xff]
    %v482 = vld [vmem:[#allocation2 + $0x90] sm:$0xff]
    %v483 = vld [vmem:[#allocation2 + $0x98] sm:$0xff]
    %v484 = vld [vmem:[#allocation2 + $0xa0] sm:$0xff]
    %v485 = vld [vmem:[#allocation2 + $0xa8] sm:$0xff]
    %v486 = vld [vmem:[#allocation2 + $0xb0] sm:$0xff]
    %v487 = vld [vmem:[#allocation2 + $0xb8] sm:$0xff]
    %v488 = vld [vmem:[#allocation2 + $0xc0] sm:$0xff]
    %v489 = vld [vmem:[#allocation2 + $0xc8] sm:$0xff]
    %v490 = vld [vmem:[#allocation2 + $0xd0] sm:$0xff]
    %v491 = vld [vmem:[#allocation2 + $0xd8] sm:$0xff]
    %v492 = vld [vmem:[#allocation2 + $0xe0] sm:$0xff]
    %v493 = vld [vmem:[#allocation2 + $0xe8] sm:$0xff]
    %v494 = vld [vmem:[#allocation2 + $0xf0] sm:$0xff]
    %v495 = vld [vmem:[#allocation2 + $0xf8] sm:$0xff]
    %v496 = vld [vmem:[#allocation2 + $0x100] sm:$0xff]
    %v497 = vld [vmem:[#allocation2 + $0x108] sm:$0xff]
    %v498 = vld [vmem:[#allocation2 + $0x110] sm:$0xff]
    %v499 = vld [vmem:[#allocation2 + $0x118] sm:$0xff]
    %v500 = vld [vmem:[#allocation2 + $0x120] sm:$0xff]
    %v501 = vld [vmem:[#allocation2 + $0x128] sm:$0xff]
    %v502 = vld [vmem:[#allocation2 + $0x130] sm:$0xff]
    %v503 = vld [vmem:[#allocation2 + $0x138] sm:$0xff]
    %v504 = vld [vmem:[#allocation2 + $0x140] sm:$0xff]
    %v505 = vld [vmem:[#allocation2 + $0x148] sm:$0xff]
    %v506 = vld [vmem:[#allocation2 + $0x150] sm:$0xff]
    %v507 = vld [vmem:[#allocation2 + $0x158] sm:$0xff]
    %v508 = vld [vmem:[#allocation2 + $0x160] sm:$0xff]
    %v509 = vld [vmem:[#allocation2 + $0x168] sm:$0xff]
    %v510 = vld [vmem:[#allocation2 + $0x170] sm:$0xff]
    %v511 = vld [vmem:[#allocation2 + $0x178] sm:$0xff]
    %v512 = vld [vmem:[#allocation2 + $0x180] sm:$0xff]
    %v513 = vld [vmem:[#allocation2 + $0x188] sm:$0xff]
    %v514 = vld [vmem:[#allocation2 + $0x190] sm:$0xff]
    %v515 = vld [vmem:[#allocation2 + $0x198] sm:$0xff]
    %v516 = vld [vmem:[#allocation2 + $0x1a0] sm:$0xff]
    %v517 = vld [vmem:[#allocation2 + $0x1a8] sm:$0xff]
    %v518 = vld [vmem:[#allocation2 + $0x1b0] sm:$0xff]
    %v519 = vld [vmem:[#allocation2 + $0x1b8] sm:$0xff]
    %v520 = vld [vmem:[#allocation2 + $0x1c0] sm:$0xff]
    %v521 = vld [vmem:[#allocation2 + $0x1c8] sm:$0xff]
    %v522 = vld [vmem:[#allocation2 + $0x1d0] sm:$0xff]
    %v523 = vld [vmem:[#allocation2 + $0x1d8] sm:$0xff]
    %v524 = vld [vmem:[#allocation2 + $0x1e0] sm:$0xff]
    %v525 = vld [vmem:[#allocation2 + $0x1e8] sm:$0xff]
    %v526 = vld [vmem:[#allocation2 + $0x1f0] sm:$0xff]
    %v527 = vld [vmem:[#allocation2 + $0x1f8] sm:$0xff]
    %528 = vmatprep.subr.mxu0 0.0
    %529 = vmatpush1.xpose.msra.mxu0 0.0
    %530 = vmatprep.subr.mxu0 0.0
    %531 = vmatpush1.xpose.msra.mxu0 0.0
    %532 = vmatprep.subr.mxu0 0.0
    %533 = vmatpush1.xpose.msra.mxu0 0.0
    %534 = vmatprep.subr.mxu0 0.0
    %535 = vmatpush1.xpose.msra.mxu0 0.0
    %536 = vmatprep.subr.mxu0 0.0
    %537 = vmatpush1.xpose.msra.mxu0 0.0
    %538 = vmatprep.subr.mxu0 0.0
    %539 = vmatpush1.xpose.msra.mxu0 0.0
    %540 = vmatprep.subr.mxu0 0.0
    %541 = vmatpush1.xpose.msra.mxu0 0.0
    %542 = vmatprep.subr.mxu0 0.0
    %543 = vmatpush1.xpose.msra.mxu0 0.0
    %544 = vmatprep.subr.mxu0 0.0
    %545 = vmatpush1.xpose.msra.mxu0 0.0
    %546 = vmatprep.subr.mxu0 0.0
    %547 = vmatpush1.xpose.msra.mxu0 0.0
    %548 = vmatprep.subr.mxu0 0.0
    %549 = vmatpush1.xpose.msra.mxu0 0.0
    %550 = vmatprep.subr.mxu0 0.0
    %551 = vmatpush1.xpose.msra.mxu0 0.0
    %552 = vmatprep.subr.mxu0 0.0
    %553 = vmatpush1.xpose.msra.mxu0 0.0
    %554 = vmatprep.subr.mxu0 0.0
    %555 = vmatpush1.xpose.msra.mxu0 0.0
    %556 = vmatprep.subr.mxu0 0.0
    %557 = vmatpush1.xpose.msra.mxu0 0.0
    %558 = vmatprep.subr.mxu0 0.0
    %559 = vmatpush1.xpose.msra.mxu0 %v460
    %560 = vmatprep.subr.mxu0 0.0
    %561 = vmatpush2.xpose.msra.mxu0 0.0
    %562 = vmatprep.subr.mxu0 0.0
    %563 = vmatpush2.xpose.msra.mxu0 0.0
    %564 = vmatprep.subr.mxu0 0.0
    %565 = vmatpush2.xpose.msra.mxu0 0.0
    %566 = vmatprep.subr.mxu0 0.0
    %567 = vmatpush2.xpose.msra.mxu0 0.0
    %568 = vmatprep.subr.mxu0 0.0
    %569 = vmatpush2.xpose.msra.mxu0 0.0
    %570 = vmatprep.subr.mxu0 0.0
    %571 = vmatpush2.xpose.msra.mxu0 0.0
    %572 = vmatprep.subr.mxu0 0.0
    %573 = vmatpush2.xpose.msra.mxu0 0.0
    %574 = vmatprep.subr.mxu0 0.0
    %575 = vmatpush2.xpose.msra.mxu0 0.0
    %576 = vmatprep.subr.mxu0 0.0
    %577 = vmatpush2.xpose.msra.mxu0 0.0
    %578 = vmatprep.subr.mxu0 0.0
    %579 = vmatpush2.xpose.msra.mxu0 0.0
    %580 = vmatprep.subr.mxu0 0.0
    %581 = vmatpush2.xpose.msra.mxu0 0.0
    %582 = vmatprep.subr.mxu0 0.0
    %583 = vmatpush2.xpose.msra.mxu0 0.0
    %584 = vmatprep.subr.mxu0 0.0
    %585 = vmatpush2.xpose.msra.mxu0 0.0
    %586 = vmatprep.subr.mxu0 0.0
    %587 = vmatpush2.xpose.msra.mxu0 0.0
    %588 = vmatprep.subr.mxu0 0.0
    %589 = vmatpush2.xpose.msra.mxu0 0.0
    %590 = vmatprep.subr.mxu0 0.0
    %591 = vmatpush2.xpose.msra.mxu0 0.0
    %592 = vmatprep.mubr.f32.mxu0 0.0
    %593 = vmatmul.mubr.f32.gmra.mxu0 %v464
    %v594 = vpop.f32.mrf.mxu0
    %v595 = vadd.f32 0.0, %v594
    %v596 = vpop.f32.mrf.mxu0
    %597 = vmatprep.mubr.f32.mxu0 0.0
    %598 = vmatmul.mubr.f32.gmra.mxu0 %v465
    %v599 = vpop.f32.mrf.mxu0
    %v600 = vadd.f32 0.0, %v599
    %v601 = vpop.f32.mrf.mxu0
    %602 = vmatprep.mubr.f32.mxu0 0.0
    %603 = vmatmul.mubr.f32.gmra.mxu0 %v466
    %v604 = vpop.f32.mrf.mxu0
    %v605 = vadd.f32 0.0, %v604
    %v606 = vpop.f32.mrf.mxu0
    %607 = vmatprep.mubr.f32.mxu0 0.0
    %608 = vmatmul.mubr.f32.gmra.mxu0 %v467
    %v609 = vpop.f32.mrf.mxu0
    %v610 = vadd.f32 0.0, %v609
    %v611 = vpop.f32.mrf.mxu0
    %612 = vmatprep.mubr.f32.mxu0 0.0
    %613 = vmatmul.mubr.f32.gmra.mxu0 %v468
    %v614 = vpop.f32.mrf.mxu0
    %v615 = vadd.f32 0.0, %v614
    %v616 = vpop.f32.mrf.mxu0
    %617 = vmatprep.mubr.f32.mxu0 0.0
    %618 = vmatmul.mubr.f32.gmra.mxu0 %v469
    %v619 = vpop.f32.mrf.mxu0
    %v620 = vadd.f32 0.0, %v619
    %v621 = vpop.f32.mrf.mxu0
    %622 = vmatprep.mubr.f32.mxu0 0.0
    %623 = vmatmul.mubr.f32.gmra.mxu0 %v470
    %v624 = vpop.f32.mrf.mxu0
    %v625 = vadd.f32 0.0, %v624
    %v626 = vpop.f32.mrf.mxu0
    %627 = vmatprep.mubr.f32.mxu0 0.0
    %628 = vmatmul.mubr.f32.gmra.mxu0 %v471
    %v629 = vpop.f32.mrf.mxu0
    %v630 = vadd.f32 0.0, %v629
    %v631 = vpop.f32.mrf.mxu0
    %632 = vmatprep.mubr.f32.mxu0 0.0
    %633 = vmatmul.mubr.f32.gmra.mxu0 %v472
    %v634 = vpop.f32.mrf.mxu0
    %v635 = vadd.f32 0.0, %v634
    %v636 = vpop.f32.mrf.mxu0
    %637 = vmatprep.mubr.f32.mxu0 0.0
    %638 = vmatmul.mubr.f32.gmra.mxu0 %v473
    %v639 = vpop.f32.mrf.mxu0
    %v640 = vadd.f32 0.0, %v639
    %v641 = vpop.f32.mrf.mxu0
    %642 = vmatprep.mubr.f32.mxu0 0.0
    %643 = vmatmul.mubr.f32.gmra.mxu0 %v474
    %v644 = vpop.f32.mrf.mxu0
    %v645 = vadd.f32 0.0, %v644
    %v646 = vpop.f32.mrf.mxu0
    %647 = vmatprep.mubr.f32.mxu0 0.0
    %648 = vmatmul.mubr.f32.gmra.mxu0 %v475
    %v649 = vpop.f32.mrf.mxu0
    %v650 = vadd.f32 0.0, %v649
    %v651 = vpop.f32.mrf.mxu0
    %652 = vmatprep.mubr.f32.mxu0 0.0
    %653 = vmatmul.mubr.f32.gmra.mxu0 %v476
    %v654 = vpop.f32.mrf.mxu0
    %v655 = vadd.f32 0.0, %v654
    %v656 = vpop.f32.mrf.mxu0
    %657 = vmatprep.mubr.f32.mxu0 0.0
    %658 = vmatmul.mubr.f32.gmra.mxu0 %v477
    %v659 = vpop.f32.mrf.mxu0
    %v660 = vadd.f32 0.0, %v659
    %v661 = vpop.f32.mrf.mxu0
    %662 = vmatprep.mubr.f32.mxu0 0.0
    %663 = vmatmul.mubr.f32.gmra.mxu0 %v478
    %v664 = vpop.f32.mrf.mxu0
    %v665 = vadd.f32 0.0, %v664
    %v666 = vpop.f32.mrf.mxu0
    %667 = vmatprep.mubr.f32.mxu0 0.0
    %668 = vmatmul.mubr.f32.gmra.mxu0 %v479
    %v669 = vpop.f32.mrf.mxu0
    %v670 = vadd.f32 0.0, %v669
    %v671 = vpop.f32.mrf.mxu0
    %672 = vmatprep.mubr.f32.mxu0 0.0
    %673 = vmatmul.mubr.f32.gmra.mxu0 %v480
    %v674 = vpop.f32.mrf.mxu0
    %v675 = vadd.f32 0.0, %v674
    %v676 = vpop.f32.mrf.mxu0
    %677 = vmatprep.mubr.f32.mxu0 0.0
    %678 = vmatmul.mubr.f32.gmra.mxu0 %v481
    %v679 = vpop.f32.mrf.mxu0
    %v680 = vadd.f32 0.0, %v679
    %v681 = vpop.f32.mrf.mxu0
    %682 = vmatprep.mubr.f32.mxu0 0.0
    %683 = vmatmul.mubr.f32.gmra.mxu0 %v482
    %v684 = vpop.f32.mrf.mxu0
    %v685 = vadd.f32 0.0, %v684
    %v686 = vpop.f32.mrf.mxu0
    %687 = vmatprep.mubr.f32.mxu0 0.0
    %688 = vmatmul.mubr.f32.gmra.mxu0 %v483
    %v689 = vpop.f32.mrf.mxu0
    %v690 = vadd.f32 0.0, %v689
    %v691 = vpop.f32.mrf.mxu0
    %692 = vmatprep.mubr.f32.mxu0 0.0
    %693 = vmatmul.mubr.f32.gmra.mxu0 %v484
    %v694 = vpop.f32.mrf.mxu0
    %v695 = vadd.f32 0.0, %v694
    %v696 = vpop.f32.mrf.mxu0
    %697 = vmatprep.mubr.f32.mxu0 0.0
    %698 = vmatmul.mubr.f32.gmra.mxu0 %v485
    %v699 = vpop.f32.mrf.mxu0
    %v700 = vadd.f32 0.0, %v699
    %v701 = vpop.f32.mrf.mxu0
    %702 = vmatprep.mubr.f32.mxu0 0.0
    %703 = vmatmul.mubr.f32.gmra.mxu0 %v486
    %v704 = vpop.f32.mrf.mxu0
    %v705 = vadd.f32 0.0, %v704
    %v706 = vpop.f32.mrf.mxu0
    %707 = vmatprep.mubr.f32.mxu0 0.0
    %708 = vmatmul.mubr.f32.gmra.mxu0 %v487
    %v709 = vpop.f32.mrf.mxu0
    %v710 = vadd.f32 0.0, %v709
    %v711 = vpop.f32.mrf.mxu0
    %712 = vmatprep.mubr.f32.mxu0 0.0
    %713 = vmatmul.mubr.f32.gmra.mxu0 %v488
    %v714 = vpop.f32.mrf.mxu0
    %v715 = vadd.f32 0.0, %v714
    %v716 = vpop.f32.mrf.mxu0
    %717 = vmatprep.mubr.f32.mxu0 0.0
    %718 = vmatmul.mubr.f32.gmra.mxu0 %v489
    %v719 = vpop.f32.mrf.mxu0
    %v720 = vadd.f32 0.0, %v719
    %v721 = vpop.f32.mrf.mxu0
    %722 = vmatprep.mubr.f32.mxu0 0.0
    %723 = vmatmul.mubr.f32.gmra.mxu0 %v490
    %v724 = vpop.f32.mrf.mxu0
    %v725 = vadd.f32 0.0, %v724
    %v726 = vpop.f32.mrf.mxu0
    %727 = vmatprep.mubr.f32.mxu0 0.0
    %728 = vmatmul.mubr.f32.gmra.mxu0 %v491
    %v729 = vpop.f32.mrf.mxu0
    %v730 = vadd.f32 0.0, %v729
    %v731 = vpop.f32.mrf.mxu0
    %732 = vmatprep.mubr.f32.mxu0 0.0
    %733 = vmatmul.mubr.f32.gmra.mxu0 %v492
    %v734 = vpop.f32.mrf.mxu0
    %v735 = vadd.f32 0.0, %v734
    %v736 = vpop.f32.mrf.mxu0
    %737 = vmatprep.mubr.f32.mxu0 0.0
    %738 = vmatmul.mubr.f32.gmra.mxu0 %v493
    %v739 = vpop.f32.mrf.mxu0
    %v740 = vadd.f32 0.0, %v739
    %v741 = vpop.f32.mrf.mxu0
    %742 = vmatprep.mubr.f32.mxu0 0.0
    %743 = vmatmul.mubr.f32.gmra.mxu0 %v494
    %v744 = vpop.f32.mrf.mxu0
    %v745 = vadd.f32 0.0, %v744
    %v746 = vpop.f32.mrf.mxu0
    %747 = vmatprep.mubr.f32.mxu0 0.0
    %748 = vmatmul.mubr.f32.gmra.mxu0 %v495
    %v749 = vpop.f32.mrf.mxu0
    %v750 = vadd.f32 0.0, %v749
    %v751 = vpop.f32.mrf.mxu0
    %752 = vmatprep.mubr.f32.mxu0 0.0
    %753 = vmatmul.mubr.f32.gmra.mxu0 %v496
    %v754 = vpop.f32.mrf.mxu0
    %v755 = vadd.f32 0.0, %v754
    %v756 = vpop.f32.mrf.mxu0
    %757 = vmatprep.mubr.f32.mxu0 0.0
    %758 = vmatmul.mubr.f32.gmra.mxu0 %v497
    %v759 = vpop.f32.mrf.mxu0
    %v760 = vadd.f32 0.0, %v759
    %v761 = vpop.f32.mrf.mxu0
    %762 = vmatprep.mubr.f32.mxu0 0.0
    %763 = vmatmul.mubr.f32.gmra.mxu0 %v498
    %v764 = vpop.f32.mrf.mxu0
    %v765 = vadd.f32 0.0, %v764
    %v766 = vpop.f32.mrf.mxu0
    %767 = vmatprep.mubr.f32.mxu0 0.0
    %768 = vmatmul.mubr.f32.gmra.mxu0 %v499
    %v769 = vpop.f32.mrf.mxu0
    %v770 = vadd.f32 0.0, %v769
    %v771 = vpop.f32.mrf.mxu0
    %772 = vmatprep.mubr.f32.mxu0 0.0
    %773 = vmatmul.mubr.f32.gmra.mxu0 %v500
    %v774 = vpop.f32.mrf.mxu0
    %v775 = vadd.f32 0.0, %v774
    %v776 = vpop.f32.mrf.mxu0
    %777 = vmatprep.mubr.f32.mxu0 0.0
    %778 = vmatmul.mubr.f32.gmra.mxu0 %v501
    %v779 = vpop.f32.mrf.mxu0
    %v780 = vadd.f32 0.0, %v779
    %v781 = vpop.f32.mrf.mxu0
    %782 = vmatprep.mubr.f32.mxu0 0.0
    %783 = vmatmul.mubr.f32.gmra.mxu0 %v502
    %v784 = vpop.f32.mrf.mxu0
    %v785 = vadd.f32 0.0, %v784
    %v786 = vpop.f32.mrf.mxu0
    %787 = vmatprep.mubr.f32.mxu0 0.0
    %788 = vmatmul.mubr.f32.gmra.mxu0 %v503
    %v789 = vpop.f32.mrf.mxu0
    %v790 = vadd.f32 0.0, %v789
    %v791 = vpop.f32.mrf.mxu0
    %792 = vmatprep.mubr.f32.mxu0 0.0
    %793 = vmatmul.mubr.f32.gmra.mxu0 %v504
    %v794 = vpop.f32.mrf.mxu0
    %v795 = vadd.f32 0.0, %v794
    %v796 = vpop.f32.mrf.mxu0
    %797 = vmatprep.mubr.f32.mxu0 0.0
    %798 = vmatmul.mubr.f32.gmra.mxu0 %v505
    %v799 = vpop.f32.mrf.mxu0
    %v800 = vadd.f32 0.0, %v799
    %v801 = vpop.f32.mrf.mxu0
    %802 = vmatprep.mubr.f32.mxu0 0.0
    %803 = vmatmul.mubr.f32.gmra.mxu0 %v506
    %v804 = vpop.f32.mrf.mxu0
    %v805 = vadd.f32 0.0, %v804
    %v806 = vpop.f32.mrf.mxu0
    %807 = vmatprep.mubr.f32.mxu0 0.0
    %808 = vmatmul.mubr.f32.gmra.mxu0 %v507
    %v809 = vpop.f32.mrf.mxu0
    %v810 = vadd.f32 0.0, %v809
    %v811 = vpop.f32.mrf.mxu0
    %812 = vmatprep.mubr.f32.mxu0 0.0
    %813 = vmatmul.mubr.f32.gmra.mxu0 %v508
    %v814 = vpop.f32.mrf.mxu0
    %v815 = vadd.f32 0.0, %v814
    %v816 = vpop.f32.mrf.mxu0
    %817 = vmatprep.mubr.f32.mxu0 0.0
    %818 = vmatmul.mubr.f32.gmra.mxu0 %v509
    %v819 = vpop.f32.mrf.mxu0
    %v820 = vadd.f32 0.0, %v819
    %v821 = vpop.f32.mrf.mxu0
    %822 = vmatprep.mubr.f32.mxu0 0.0
    %823 = vmatmul.mubr.f32.gmra.mxu0 %v510
    %v824 = vpop.f32.mrf.mxu0
    %v825 = vadd.f32 0.0, %v824
    %v826 = vpop.f32.mrf.mxu0
    %827 = vmatprep.mubr.f32.mxu0 0.0
    %828 = vmatmul.mubr.f32.gmra.mxu0 %v511
    %v829 = vpop.f32.mrf.mxu0
    %v830 = vadd.f32 0.0, %v829
    %v831 = vpop.f32.mrf.mxu0
    %832 = vmatprep.mubr.f32.mxu0 0.0
    %833 = vmatmul.mubr.f32.gmra.mxu0 %v512
    %v834 = vpop.f32.mrf.mxu0
    %v835 = vadd.f32 0.0, %v834
    %v836 = vpop.f32.mrf.mxu0
    %837 = vmatprep.mubr.f32.mxu0 0.0
    %838 = vmatmul.mubr.f32.gmra.mxu0 %v513
    %v839 = vpop.f32.mrf.mxu0
    %v840 = vadd.f32 0.0, %v839
    %v841 = vpop.f32.mrf.mxu0
    %842 = vmatprep.mubr.f32.mxu0 0.0
    %843 = vmatmul.mubr.f32.gmra.mxu0 %v514
    %v844 = vpop.f32.mrf.mxu0
    %v845 = vadd.f32 0.0, %v844
    %v846 = vpop.f32.mrf.mxu0
    %847 = vmatprep.mubr.f32.mxu0 0.0
    %848 = vmatmul.mubr.f32.gmra.mxu0 %v515
    %v849 = vpop.f32.mrf.mxu0
    %v850 = vadd.f32 0.0, %v849
    %v851 = vpop.f32.mrf.mxu0
    %852 = vmatprep.mubr.f32.mxu0 0.0
    %853 = vmatmul.mubr.f32.gmra.mxu0 %v516
    %v854 = vpop.f32.mrf.mxu0
    %v855 = vadd.f32 0.0, %v854
    %v856 = vpop.f32.mrf.mxu0
    %857 = vmatprep.mubr.f32.mxu0 0.0
    %858 = vmatmul.mubr.f32.gmra.mxu0 %v517
    %v859 = vpop.f32.mrf.mxu0
    %v860 = vadd.f32 0.0, %v859
    %v861 = vpop.f32.mrf.mxu0
    %862 = vmatprep.mubr.f32.mxu0 0.0
    %863 = vmatmul.mubr.f32.gmra.mxu0 %v518
    %v864 = vpop.f32.mrf.mxu0
    %v865 = vadd.f32 0.0, %v864
    %v866 = vpop.f32.mrf.mxu0
    %867 = vmatprep.mubr.f32.mxu0 0.0
    %868 = vmatmul.mubr.f32.gmra.mxu0 %v519
    %v869 = vpop.f32.mrf.mxu0
    %v870 = vadd.f32 0.0, %v869
    %v871 = vpop.f32.mrf.mxu0
    %872 = vmatprep.mubr.f32.mxu0 0.0
    %873 = vmatmul.mubr.f32.gmra.mxu0 %v520
    %v874 = vpop.f32.mrf.mxu0
    %v875 = vadd.f32 0.0, %v874
    %v876 = vpop.f32.mrf.mxu0
    %877 = vmatprep.mubr.f32.mxu0 0.0
    %878 = vmatmul.mubr.f32.gmra.mxu0 %v521
    %v879 = vpop.f32.mrf.mxu0
    %v880 = vadd.f32 0.0, %v879
    %v881 = vpop.f32.mrf.mxu0
    %882 = vmatprep.mubr.f32.mxu0 0.0
    %883 = vmatmul.mubr.f32.gmra.mxu0 %v522
    %v884 = vpop.f32.mrf.mxu0
    %v885 = vadd.f32 0.0, %v884
    %v886 = vpop.f32.mrf.mxu0
    %887 = vmatprep.mubr.f32.mxu0 0.0
    %888 = vmatmul.mubr.f32.gmra.mxu0 %v523
    %v889 = vpop.f32.mrf.mxu0
    %v890 = vadd.f32 0.0, %v889
    %v891 = vpop.f32.mrf.mxu0
    %892 = vmatprep.mubr.f32.mxu0 0.0
    %893 = vmatmul.mubr.f32.gmra.mxu0 %v524
    %v894 = vpop.f32.mrf.mxu0
    %v895 = vadd.f32 0.0, %v894
    %v896 = vpop.f32.mrf.mxu0
    %897 = vmatprep.mubr.f32.mxu0 0.0
    %898 = vmatmul.mubr.f32.gmra.mxu0 %v525
    %v899 = vpop.f32.mrf.mxu0
    %v900 = vadd.f32 0.0, %v899
    %v901 = vpop.f32.mrf.mxu0
    %902 = vmatprep.mubr.f32.mxu0 0.0
    %903 = vmatmul.mubr.f32.gmra.mxu0 %v526
    %v904 = vpop.f32.mrf.mxu0
    %v905 = vadd.f32 0.0, %v904
    %v906 = vpop.f32.mrf.mxu0
    %907 = vmatprep.mubr.f32.mxu0 0.0
    %908 = vmatmul.mubr.f32.gmra.mxu0 %v527
    %v909 = vpop.f32.mrf.mxu0
    %v910 = vadd.f32 0.0, %v909
    %v911 = vpop.f32.mrf.mxu0
    %912 = vdwg.mxu0
    %v913 = vmul.f32 %v595, 2.0
    %v914 = vmul.f32 %v600, 2.0
    %v915 = vmul.f32 %v605, 2.0
    %v916 = vmul.f32 %v610, 2.0
    %v917 = vmul.f32 %v615, 2.0
    %v918 = vmul.f32 %v620, 2.0
    %v919 = vmul.f32 %v625, 2.0
    %v920 = vmul.f32 %v630, 2.0
    %v921 = vmul.f32 %v635, 2.0
    %v922 = vmul.f32 %v640, 2.0
    %v923 = vmul.f32 %v645, 2.0
    %v924 = vmul.f32 %v650, 2.0
    %v925 = vmul.f32 %v655, 2.0
    %v926 = vmul.f32 %v660, 2.0
    %v927 = vmul.f32 %v665, 2.0
    %v928 = vmul.f32 %v670, 2.0
    %v929 = vmul.f32 %v675, 2.0
    %v930 = vmul.f32 %v680, 2.0
    %v931 = vmul.f32 %v685, 2.0
    %v932 = vmul.f32 %v690, 2.0
    %v933 = vmul.f32 %v695, 2.0
    %v934 = vmul.f32 %v700, 2.0
    %v935 = vmul.f32 %v705, 2.0
    %v936 = vmul.f32 %v710, 2.0
    %v937 = vmul.f32 %v715, 2.0
    %v938 = vmul.f32 %v720, 2.0
    %v939 = vmul.f32 %v725, 2.0
    %v940 = vmul.f32 %v730, 2.0
    %v941 = vmul.f32 %v735, 2.0
    %v942 = vmul.f32 %v740, 2.0
    %v943 = vmul.f32 %v745, 2.0
    %v944 = vmul.f32 %v750, 2.0
    %v945 = vmul.f32 %v755, 2.0
    %v946 = vmul.f32 %v760, 2.0
    %v947 = vmul.f32 %v765, 2.0
    %v948 = vmul.f32 %v770, 2.0
    %v949 = vmul.f32 %v775, 2.0
    %v950 = vmul.f32 %v780, 2.0
    %v951 = vmul.f32 %v785, 2.0
    %v952 = vmul.f32 %v790, 2.0
    %v953 = vmul.f32 %v795, 2.0
    %v954 = vmul.f32 %v800, 2.0
    %v955 = vmul.f32 %v805, 2.0
    %v956 = vmul.f32 %v810, 2.0
    %v957 = vmul.f32 %v815, 2.0
    %v958 = vmul.f32 %v820, 2.0
    %v959 = vmul.f32 %v825, 2.0
    %v960 = vmul.f32 %v830, 2.0
    %v961 = vmul.f32 %v835, 2.0
    %v962 = vmul.f32 %v840, 2.0
    %v963 = vmul.f32 %v845, 2.0
    %v964 = vmul.f32 %v850, 2.0
    %v965 = vmul.f32 %v855, 2.0
    %v966 = vmul.f32 %v860, 2.0
    %v967 = vmul.f32 %v865, 2.0
    %v968 = vmul.f32 %v870, 2.0
    %v969 = vmul.f32 %v875, 2.0
    %v970 = vmul.f32 %v880, 2.0
    %v971 = vmul.f32 %v885, 2.0
    %v972 = vmul.f32 %v890, 2.0
    %v973 = vmul.f32 %v895, 2.0
    %v974 = vmul.f32 %v900, 2.0
    %v975 = vmul.f32 %v905, 2.0
    %v976 = vmul.f32 %v910, 2.0
    %v977 = vld [vmem:[%s5] sm:$0xff]
    %v978 = vld [vmem:[%s5 + $0x8] sm:$0xff]
    %v979 = vld [vmem:[%s5 + $0x10] sm:$0xff]
    %v980 = vld [vmem:[%s5 + $0x18] sm:$0xff]
    %v981 = vld [vmem:[%s5 + $0x20] sm:$0xff]
    %v982 = vld [vmem:[%s5 + $0x28] sm:$0xff]
    %v983 = vld [vmem:[%s5 + $0x30] sm:$0xff]
    %v984 = vld [vmem:[%s5 + $0x38] sm:$0xff]
    %v985 = vld [vmem:[%s5 + $0x40] sm:$0xff]
    %v986 = vld [vmem:[%s5 + $0x48] sm:$0xff]
    %v987 = vld [vmem:[%s5 + $0x50] sm:$0xff]
    %v988 = vld [vmem:[%s5 + $0x58] sm:$0xff]
    %v989 = vld [vmem:[%s5 + $0x60] sm:$0xff]
    %v990 = vld [vmem:[%s5 + $0x68] sm:$0xff]
    %v991 = vld [vmem:[%s5 + $0x70] sm:$0xff]
    %v992 = vld [vmem:[%s5 + $0x78] sm:$0xff]
    %v993 = vld [vmem:[%s5 + $0x80] sm:$0xff]
    %v994 = vld [vmem:[%s5 + $0x88] sm:$0xff]
    %v995 = vld [vmem:[%s5 + $0x90] sm:$0xff]
    %v996 = vld [vmem:[%s5 + $0x98] sm:$0xff]
    %v997 = vld [vmem:[%s5 + $0xa0] sm:$0xff]
    %v998 = vld [vmem:[%s5 + $0xa8] sm:$0xff]
    %v999 = vld [vmem:[%s5 + $0xb0] sm:$0xff]
    %v1000 = vld [vmem:[%s5 + $0xb8] sm:$0xff]
    %v1001 = vld [vmem:[%s5 + $0xc0] sm:$0xff]
    %v1002 = vld [vmem:[%s5 + $0xc8] sm:$0xff]
    %v1003 = vld [vmem:[%s5 + $0xd0] sm:$0xff]
    %v1004 = vld [vmem:[%s5 + $0xd8] sm:$0xff]
    %v1005 = vld [vmem:[%s5 + $0xe0] sm:$0xff]
    %v1006 = vld [vmem:[%s5 + $0xe8] sm:$0xff]
    %v1007 = vld [vmem:[%s5 + $0xf0] sm:$0xff]
    %v1008 = vld [vmem:[%s5 + $0xf8] sm:$0xff]
    %v1009 = vld [vmem:[%s5 + $0x100] sm:$0xff]
    %v1010 = vld [vmem:[%s5 + $0x108] sm:$0xff]
    %v1011 = vld [vmem:[%s5 + $0x110] sm:$0xff]
    %v1012 = vld [vmem:[%s5 + $0x118] sm:$0xff]
    %v1013 = vld [vmem:[%s5 + $0x120] sm:$0xff]
    %v1014 = vld [vmem:[%s5 + $0x128] sm:$0xff]
    %v1015 = vld [vmem:[%s5 + $0x130] sm:$0xff]
    %v1016 = vld [vmem:[%s5 + $0x138] sm:$0xff]
    %v1017 = vld [vmem:[%s5 + $0x140] sm:$0xff]
    %v1018 = vld [vmem:[%s5 + $0x148] sm:$0xff]
    %v1019 = vld [vmem:[%s5 + $0x150] sm:$0xff]
    %v1020 = vld [vmem:[%s5 + $0x158] sm:$0xff]
    %v1021 = vld [vmem:[%s5 + $0x160] sm:$0xff]
    %v1022 = vld [vmem:[%s5 + $0x168] sm:$0xff]
    %v1023 = vld [vmem:[%s5 + $0x170] sm:$0xff]
    %v1024 = vld [vmem:[%s5 + $0x178] sm:$0xff]
    %v1025 = vld [vmem:[%s5 + $0x180] sm:$0xff]
    %v1026 = vld [vmem:[%s5 + $0x188] sm:$0xff]
    %v1027 = vld [vmem:[%s5 + $0x190] sm:$0xff]
    %v1028 = vld [vmem:[%s5 + $0x198] sm:$0xff]
    %v1029 = vld [vmem:[%s5 + $0x1a0] sm:$0xff]
    %v1030 = vld [vmem:[%s5 + $0x1a8] sm:$0xff]
    %v1031 = vld [vmem:[%s5 + $0x1b0] sm:$0xff]
    %v1032 = vld [vmem:[%s5 + $0x1b8] sm:$0xff]
    %v1033 = vld [vmem:[%s5 + $0x1c0] sm:$0xff]
    %v1034 = vld [vmem:[%s5 + $0x1c8] sm:$0xff]
    %v1035 = vld [vmem:[%s5 + $0x1d0] sm:$0xff]
    %v1036 = vld [vmem:[%s5 + $0x1d8] sm:$0xff]
    %v1037 = vld [vmem:[%s5 + $0x1e0] sm:$0xff]
    %v1038 = vld [vmem:[%s5 + $0x1e8] sm:$0xff]
    %v1039 = vld [vmem:[%s5 + $0x1f0] sm:$0xff]
    %v1040 = vld [vmem:[%s5 + $0x1f8] sm:$0xff]
    %1042 = vset.pattern.permute.xlu0 0
    %1043 = vperm.xlu0 %1042, %v977
    %v1044 = vpop.permute.xlu0 %1043
    %1047 = vset.pattern.permute.xlu0 0
    %1048 = vperm.xlu0 %1047, %v978
    %v1049 = vpop.permute.xlu0 %1048
    %1052 = vset.pattern.permute.xlu0 0
    %1053 = vperm.xlu0 %1052, %v979
    %v1054 = vpop.permute.xlu0 %1053
    %1057 = vset.pattern.permute.xlu0 0
    %1058 = vperm.xlu0 %1057, %v980
    %v1059 = vpop.permute.xlu0 %1058
    %1062 = vset.pattern.permute.xlu0 0
    %1063 = vperm.xlu0 %1062, %v981
    %v1064 = vpop.permute.xlu0 %1063
    %1067 = vset.pattern.permute.xlu0 0
    %1068 = vperm.xlu0 %1067, %v982
    %v1069 = vpop.permute.xlu0 %1068
    %1072 = vset.pattern.permute.xlu0 0
    %1073 = vperm.xlu0 %1072, %v983
    %v1074 = vpop.permute.xlu0 %1073
    %1077 = vset.pattern.permute.xlu0 0
    %1078 = vperm.xlu0 %1077, %v984
    %v1079 = vpop.permute.xlu0 %1078
    %1082 = vset.pattern.permute.xlu0 0
    %1083 = vperm.xlu0 %1082, %v985
    %v1084 = vpop.permute.xlu0 %1083
    %1087 = vset.pattern.permute.xlu0 0
    %1088 = vperm.xlu0 %1087, %v986
    %v1089 = vpop.permute.xlu0 %1088
    %1092 = vset.pattern.permute.xlu0 0
    %1093 = vperm.xlu0 %1092, %v987
    %v1094 = vpop.permute.xlu0 %1093
    %1097 = vset.pattern.permute.xlu0 0
    %1098 = vperm.xlu0 %1097, %v988
    %v1099 = vpop.permute.xlu0 %1098
    %1102 = vset.pattern.permute.xlu0 0
    %1103 = vperm.xlu0 %1102, %v989
    %v1104 = vpop.permute.xlu0 %1103
    %1107 = vset.pattern.permute.xlu0 0
    %1108 = vperm.xlu0 %1107, %v990
    %v1109 = vpop.permute.xlu0 %1108
    %1112 = vset.pattern.permute.xlu0 0
    %1113 = vperm.xlu0 %1112, %v991
    %v1114 = vpop.permute.xlu0 %1113
    %1117 = vset.pattern.permute.xlu0 0
    %1118 = vperm.xlu0 %1117, %v992
    %v1119 = vpop.permute.xlu0 %1118
    %1122 = vset.pattern.permute.xlu0 0
    %1123 = vperm.xlu0 %1122, %v993
    %v1124 = vpop.permute.xlu0 %1123
    %1127 = vset.pattern.permute.xlu0 0
    %1128 = vperm.xlu0 %1127, %v994
    %v1129 = vpop.permute.xlu0 %1128
    %1132 = vset.pattern.permute.xlu0 0
    %1133 = vperm.xlu0 %1132, %v995
    %v1134 = vpop.permute.xlu0 %1133
    %1137 = vset.pattern.permute.xlu0 0
    %1138 = vperm.xlu0 %1137, %v996
    %v1139 = vpop.permute.xlu0 %1138
    %1142 = vset.pattern.permute.xlu0 0
    %1143 = vperm.xlu0 %1142, %v997
    %v1144 = vpop.permute.xlu0 %1143
    %1147 = vset.pattern.permute.xlu0 0
    %1148 = vperm.xlu0 %1147, %v998
    %v1149 = vpop.permute.xlu0 %1148
    %1152 = vset.pattern.permute.xlu0 0
    %1153 = vperm.xlu0 %1152, %v999
    %v1154 = vpop.permute.xlu0 %1153
    %1157 = vset.pattern.permute.xlu0 0
    %1158 = vperm.xlu0 %1157, %v1000
    %v1159 = vpop.permute.xlu0 %1158
    %1162 = vset.pattern.permute.xlu0 0
    %1163 = vperm.xlu0 %1162, %v1001
    %v1164 = vpop.permute.xlu0 %1163
    %1167 = vset.pattern.permute.xlu0 0
    %1168 = vperm.xlu0 %1167, %v1002
    %v1169 = vpop.permute.xlu0 %1168
    %1172 = vset.pattern.permute.xlu0 0
    %1173 = vperm.xlu0 %1172, %v1003
    %v1174 = vpop.permute.xlu0 %1173
    %1177 = vset.pattern.permute.xlu0 0
    %1178 = vperm.xlu0 %1177, %v1004
    %v1179 = vpop.permute.xlu0 %1178
    %1182 = vset.pattern.permute.xlu0 0
    %1183 = vperm.xlu0 %1182, %v1005
    %v1184 = vpop.permute.xlu0 %1183
    %1187 = vset.pattern.permute.xlu0 0
    %1188 = vperm.xlu0 %1187, %v1006
    %v1189 = vpop.permute.xlu0 %1188
    %1192 = vset.pattern.permute.xlu0 0
    %1193 = vperm.xlu0 %1192, %v1007
    %v1194 = vpop.permute.xlu0 %1193
    %1197 = vset.pattern.permute.xlu0 0
    %1198 = vperm.xlu0 %1197, %v1008
    %v1199 = vpop.permute.xlu0 %1198
    %1202 = vset.pattern.permute.xlu0 0
    %1203 = vperm.xlu0 %1202, %v1009
    %v1204 = vpop.permute.xlu0 %1203
    %1207 = vset.pattern.permute.xlu0 0
    %1208 = vperm.xlu0 %1207, %v1010
    %v1209 = vpop.permute.xlu0 %1208
    %1212 = vset.pattern.permute.xlu0 0
    %1213 = vperm.xlu0 %1212, %v1011
    %v1214 = vpop.permute.xlu0 %1213
    %1217 = vset.pattern.permute.xlu0 0
    %1218 = vperm.xlu0 %1217, %v1012
    %v1219 = vpop.permute.xlu0 %1218
    %1222 = vset.pattern.permute.xlu0 0
    %1223 = vperm.xlu0 %1222, %v1013
    %v1224 = vpop.permute.xlu0 %1223
    %1227 = vset.pattern.permute.xlu0 0
    %1228 = vperm.xlu0 %1227, %v1014
    %v1229 = vpop.permute.xlu0 %1228
    %1232 = vset.pattern.permute.xlu0 0
    %1233 = vperm.xlu0 %1232, %v1015
    %v1234 = vpop.permute.xlu0 %1233
    %1237 = vset.pattern.permute.xlu0 0
    %1238 = vperm.xlu0 %1237, %v1016
    %v1239 = vpop.permute.xlu0 %1238
    %1242 = vset.pattern.permute.xlu0 0
    %1243 = vperm.xlu0 %1242, %v1017
    %v1244 = vpop.permute.xlu0 %1243
    %1247 = vset.pattern.permute.xlu0 0
    %1248 = vperm.xlu0 %1247, %v1018
    %v1249 = vpop.permute.xlu0 %1248
    %1252 = vset.pattern.permute.xlu0 0
    %1253 = vperm.xlu0 %1252, %v1019
    %v1254 = vpop.permute.xlu0 %1253
    %1257 = vset.pattern.permute.xlu0 0
    %1258 = vperm.xlu0 %1257, %v1020
    %v1259 = vpop.permute.xlu0 %1258
    %1262 = vset.pattern.permute.xlu0 0
    %1263 = vperm.xlu0 %1262, %v1021
    %v1264 = vpop.permute.xlu0 %1263
    %1267 = vset.pattern.permute.xlu0 0
    %1268 = vperm.xlu0 %1267, %v1022
    %v1269 = vpop.permute.xlu0 %1268
    %1272 = vset.pattern.permute.xlu0 0
    %1273 = vperm.xlu0 %1272, %v1023
    %v1274 = vpop.permute.xlu0 %1273
    %1277 = vset.pattern.permute.xlu0 0
    %1278 = vperm.xlu0 %1277, %v1024
    %v1279 = vpop.permute.xlu0 %1278
    %1282 = vset.pattern.permute.xlu0 0
    %1283 = vperm.xlu0 %1282, %v1025
    %v1284 = vpop.permute.xlu0 %1283
    %1287 = vset.pattern.permute.xlu0 0
    %1288 = vperm.xlu0 %1287, %v1026
    %v1289 = vpop.permute.xlu0 %1288
    %1292 = vset.pattern.permute.xlu0 0
    %1293 = vperm.xlu0 %1292, %v1027
    %v1294 = vpop.permute.xlu0 %1293
    %1297 = vset.pattern.permute.xlu0 0
    %1298 = vperm.xlu0 %1297, %v1028
    %v1299 = vpop.permute.xlu0 %1298
    %1302 = vset.pattern.permute.xlu0 0
    %1303 = vperm.xlu0 %1302, %v1029
    %v1304 = vpop.permute.xlu0 %1303
    %1307 = vset.pattern.permute.xlu0 0
    %1308 = vperm.xlu0 %1307, %v1030
    %v1309 = vpop.permute.xlu0 %1308
    %1312 = vset.pattern.permute.xlu0 0
    %1313 = vperm.xlu0 %1312, %v1031
    %v1314 = vpop.permute.xlu0 %1313
    %1317 = vset.pattern.permute.xlu0 0
    %1318 = vperm.xlu0 %1317, %v1032
    %v1319 = vpop.permute.xlu0 %1318
    %1322 = vset.pattern.permute.xlu0 0
    %1323 = vperm.xlu0 %1322, %v1033
    %v1324 = vpop.permute.xlu0 %1323
    %1327 = vset.pattern.permute.xlu0 0
    %1328 = vperm.xlu0 %1327, %v1034
    %v1329 = vpop.permute.xlu0 %1328
    %1332 = vset.pattern.permute.xlu0 0
    %1333 = vperm.xlu0 %1332, %v1035
    %v1334 = vpop.permute.xlu0 %1333
    %1337 = vset.pattern.permute.xlu0 0
    %1338 = vperm.xlu0 %1337, %v1036
    %v1339 = vpop.permute.xlu0 %1338
    %1342 = vset.pattern.permute.xlu0 0
    %1343 = vperm.xlu0 %1342, %v1037
    %v1344 = vpop.permute.xlu0 %1343
    %1347 = vset.pattern.permute.xlu0 0
    %1348 = vperm.xlu0 %1347, %v1038
    %v1349 = vpop.permute.xlu0 %1348
    %1352 = vset.pattern.permute.xlu0 0
    %1353 = vperm.xlu0 %1352, %v1039
    %v1354 = vpop.permute.xlu0 %1353
    %1357 = vset.pattern.permute.xlu0 0
    %1358 = vperm.xlu0 %1357, %v1040
    %v1359 = vpop.permute.xlu0 %1358
    %v1361 = vsub.f32 %v913, %v1044
    %v1362 = vsub.f32 %v914, %v1049
    %v1363 = vsub.f32 %v915, %v1054
    %v1364 = vsub.f32 %v916, %v1059
    %v1365 = vsub.f32 %v917, %v1064
    %v1366 = vsub.f32 %v918, %v1069
    %v1367 = vsub.f32 %v919, %v1074
    %v1368 = vsub.f32 %v920, %v1079
    %v1369 = vsub.f32 %v921, %v1084
    %v1370 = vsub.f32 %v922, %v1089
    %v1371 = vsub.f32 %v923, %v1094
    %v1372 = vsub.f32 %v924, %v1099
    %v1373 = vsub.f32 %v925, %v1104
    %v1374 = vsub.f32 %v926, %v1109
    %v1375 = vsub.f32 %v927, %v1114
    %v1376 = vsub.f32 %v928, %v1119
    %v1377 = vsub.f32 %v929, %v1124
    %v1378 = vsub.f32 %v930, %v1129
    %v1379 = vsub.f32 %v931, %v1134
    %v1380 = vsub.f32 %v932, %v1139
    %v1381 = vsub.f32 %v933, %v1144
    %v1382 = vsub.f32 %v934, %v1149
    %v1383 = vsub.f32 %v935, %v1154
    %v1384 = vsub.f32 %v936, %v1159
    %v1385 = vsub.f32 %v937, %v1164
    %v1386 = vsub.f32 %v938, %v1169
    %v1387 = vsub.f32 %v939, %v1174
    %v1388 = vsub.f32 %v940, %v1179
    %v1389 = vsub.f32 %v941, %v1184
    %v1390 = vsub.f32 %v942, %v1189
    %v1391 = vsub.f32 %v943, %v1194
    %v1392 = vsub.f32 %v944, %v1199
    %v1393 = vsub.f32 %v945, %v1204
    %v1394 = vsub.f32 %v946, %v1209
    %v1395 = vsub.f32 %v947, %v1214
    %v1396 = vsub.f32 %v948, %v1219
    %v1397 = vsub.f32 %v949, %v1224
    %v1398 = vsub.f32 %v950, %v1229
    %v1399 = vsub.f32 %v951, %v1234
    %v1400 = vsub.f32 %v952, %v1239
    %v1401 = vsub.f32 %v953, %v1244
    %v1402 = vsub.f32 %v954, %v1249
    %v1403 = vsub.f32 %v955, %v1254
    %v1404 = vsub.f32 %v956, %v1259
    %v1405 = vsub.f32 %v957, %v1264
    %v1406 = vsub.f32 %v958, %v1269
    %v1407 = vsub.f32 %v959, %v1274
    %v1408 = vsub.f32 %v960, %v1279
    %v1409 = vsub.f32 %v961, %v1284
    %v1410 = vsub.f32 %v962, %v1289
    %v1411 = vsub.f32 %v963, %v1294
    %v1412 = vsub.f32 %v964, %v1299
    %v1413 = vsub.f32 %v965, %v1304
    %v1414 = vsub.f32 %v966, %v1309
    %v1415 = vsub.f32 %v967, %v1314
    %v1416 = vsub.f32 %v968, %v1319
    %v1417 = vsub.f32 %v969, %v1324
    %v1418 = vsub.f32 %v970, %v1329
    %v1419 = vsub.f32 %v971, %v1334
    %v1420 = vsub.f32 %v972, %v1339
    %v1421 = vsub.f32 %v973, %v1344
    %v1422 = vsub.f32 %v974, %v1349
    %v1423 = vsub.f32 %v975, %v1354
    %v1424 = vsub.f32 %v976, %v1359
    %v1425 = vlaneseq
    %v1426 = vshrl.u32 %v1425, 7
    %v1427 = vadd.s32 %v1426, 8
    %v1428 = vadd.s32 %v1426, 16
    %v1429 = vadd.s32 %v1426, 24
    %v1430 = vadd.s32 %v1426, 32
    %v1431 = vadd.s32 %v1426, 40
    %v1432 = vadd.s32 %v1426, 48
    %v1433 = vadd.s32 %v1426, 56
    %v1434 = vadd.s32 %v1426, 64
    %v1435 = vadd.s32 %v1426, 72
    %v1436 = vadd.s32 %v1426, 80
    %v1437 = vadd.s32 %v1426, 88
    %v1438 = vadd.s32 %v1426, 96
    %v1439 = vadd.s32 %v1426, 104
    %v1440 = vadd.s32 %v1426, 112
    %v1441 = vadd.s32 %v1426, 120
    %v1442 = vld [vmem:[%s0] sm:$0x1]
    %vm1443 = vcmask 64512
    %v1444 = vsel %vm1443, %v1361, -inf
    %v1445 = vsel %vm1443, %v1362, -inf
    %v1446 = vsel %vm1443, %v1363, -inf
    %v1447 = vsel %vm1443, %v1364, -inf
    %v1448 = vsel %vm1443, %v1365, -inf
    %v1449 = vmax.f32 %v1444, %v1448
    %v1450 = vsel %vm1443, %v1366, -inf
    %v1451 = vmax.f32 %v1445, %v1450
    %v1452 = vsel %vm1443, %v1367, -inf
    %v1453 = vmax.f32 %v1446, %v1452
    %v1454 = vsel %vm1443, %v1368, -inf
    %v1455 = vmax.f32 %v1447, %v1454
    %v1456 = vsel %vm1443, %v1369, -inf
    %v1457 = vmax.f32 %v1449, %v1456
    %v1458 = vsel %vm1443, %v1370, -inf
    %v1459 = vmax.f32 %v1451, %v1458
    %v1460 = vsel %vm1443, %v1371, -inf
    %v1461 = vmax.f32 %v1453, %v1460
    %v1462 = vsel %vm1443, %v1372, -inf
    %v1463 = vmax.f32 %v1455, %v1462
    %v1464 = vsel %vm1443, %v1373, -inf
    %v1465 = vmax.f32 %v1457, %v1464
    %v1466 = vsel %vm1443, %v1374, -inf
    %v1467 = vmax.f32 %v1459, %v1466
    %v1468 = vsel %vm1443, %v1375, -inf
    %v1469 = vmax.f32 %v1461, %v1468
    %v1470 = vsel %vm1443, %v1376, -inf
    %v1471 = vmax.f32 %v1463, %v1470
    %v1472 = vmax.f32 %v1465, %v1467
    %v1473 = vmax.f32 %v1469, %v1471
    %v1474 = vmax.f32 %v1472, %v1473
    %v1475 = vrot.slane %v1474, 4
    %v1476 = vmax.f32 %v1474, %v1475
    %v1477 = vrot.slane %v1476, 2
    %v1478 = vmax.f32 %v1476, %v1477
    %v1479 = vrot.slane %v1478, 1
    %v1480 = vmax.f32 %v1478, %v1479
    %v1481 = vsub.f32 %v1361, %v1480
    %v1482 = vsub.f32 %v1362, %v1480
    %v1483 = vsub.f32 %v1363, %v1480
    %v1484 = vsub.f32 %v1364, %v1480
    %v1485 = vsub.f32 %v1365, %v1480
    %v1486 = vsub.f32 %v1366, %v1480
    %v1487 = vsub.f32 %v1367, %v1480
    %v1488 = vsub.f32 %v1368, %v1480
    %v1489 = vsub.f32 %v1369, %v1480
    %v1490 = vsub.f32 %v1370, %v1480
    %v1491 = vsub.f32 %v1371, %v1480
    %v1492 = vsub.f32 %v1372, %v1480
    %v1493 = vsub.f32 %v1373, %v1480
    %v1494 = vsub.f32 %v1374, %v1480
    %v1495 = vsub.f32 %v1375, %v1480
    %v1496 = vsub.f32 %v1376, %v1480
    %v1497 = vmul.f32 %v1481, 1.442695
    %v1498 = vpow.pop %v1497
    %v1499 = vmul.f32 %v1482, 1.442695
    %v1500 = vpow.pop %v1499
    %v1501 = vmul.f32 %v1483, 1.442695
    %v1502 = vpow.pop %v1501
    %v1503 = vmul.f32 %v1484, 1.442695
    %v1504 = vpow.pop %v1503
    %v1505 = vmul.f32 %v1485, 1.442695
    %v1506 = vpow.pop %v1505
    %v1507 = vmul.f32 %v1486, 1.442695
    %v1508 = vpow.pop %v1507
    %v1509 = vmul.f32 %v1487, 1.442695
    %v1510 = vpow.pop %v1509
    %v1511 = vmul.f32 %v1488, 1.442695
    %v1512 = vpow.pop %v1511
    %v1513 = vmul.f32 %v1489, 1.442695
    %v1514 = vpow.pop %v1513
    %v1515 = vmul.f32 %v1490, 1.442695
    %v1516 = vpow.pop %v1515
    %v1517 = vmul.f32 %v1491, 1.442695
    %v1518 = vpow.pop %v1517
    %v1519 = vmul.f32 %v1492, 1.442695
    %v1520 = vpow.pop %v1519
    %v1521 = vmul.f32 %v1493, 1.442695
    %v1522 = vpow.pop %v1521
    %v1523 = vmul.f32 %v1494, 1.442695
    %v1524 = vpow.pop %v1523
    %v1525 = vmul.f32 %v1495, 1.442695
    %v1526 = vpow.pop %v1525
    %v1527 = vmul.f32 %v1496, 1.442695
    %v1528 = vpow.pop %v1527
    %v1529 = vsel %vm1443, %v1498, 0.0
    %v1530 = vsel %vm1443, %v1500, 0.0
    %v1531 = vadd.f32 %v1529, %v1530
    %v1532 = vsel %vm1443, %v1502, 0.0
    %v1533 = vadd.f32 %v1531, %v1532
    %v1534 = vsel %vm1443, %v1504, 0.0
    %v1535 = vadd.f32 %v1533, %v1534
    %v1536 = vsel %vm1443, %v1506, 0.0
    %v1537 = vadd.f32 %v1535, %v1536
    %v1538 = vsel %vm1443, %v1508, 0.0
    %v1539 = vadd.f32 %v1537, %v1538
    %v1540 = vsel %vm1443, %v1510, 0.0
    %v1541 = vadd.f32 %v1539, %v1540
    %v1542 = vsel %vm1443, %v1512, 0.0
    %v1543 = vadd.f32 %v1541, %v1542
    %v1544 = vsel %vm1443, %v1514, 0.0
    %v1545 = vadd.f32 %v1543, %v1544
    %v1546 = vsel %vm1443, %v1516, 0.0
    %v1547 = vadd.f32 %v1545, %v1546
    %v1548 = vsel %vm1443, %v1518, 0.0
    %v1549 = vadd.f32 %v1547, %v1548
    %v1550 = vsel %vm1443, %v1520, 0.0
    %v1551 = vadd.f32 %v1549, %v1550
    %v1552 = vsel %vm1443, %v1522, 0.0
    %v1553 = vadd.f32 %v1551, %v1552
    %v1554 = vsel %vm1443, %v1524, 0.0
    %v1555 = vadd.f32 %v1553, %v1554
    %v1556 = vsel %vm1443, %v1526, 0.0
    %v1557 = vadd.f32 %v1555, %v1556
    %v1558 = vsel %vm1443, %v1528, 0.0
    %v1559 = vadd.f32 %v1557, %v1558
    %v1560 = vrot.slane %v1559, 4
    %v1561 = vadd.f32 %v1559, %v1560
    %v1562 = vrot.slane %v1561, 2
    %v1563 = vadd.f32 %v1561, %v1562
    %v1564 = vrot.slane %v1563, 1
    %v1565 = vadd.f32 %v1563, %v1564
    %v1566 = vlog2.pop %v1565
    %v1567 = vmul.f32 %v1566, 0.6931472
    %v1568 = vadd.f32 %v1480, %v1567
    %v1569 = vlaneseq
    %v1570 = vshrl.u32 %v1569, 7
    %v1571 = vsub.s32 0, %v1570
    %v1572 = vrot.slane %v1442, %v1571
    %vm1573 = vcmp.eq.s32.totalorder %v1426, %v1572
    %vm1574 = vcmp.eq.s32.totalorder %v1427, %v1572
    %vm1575 = vcmp.eq.s32.totalorder %v1428, %v1572
    %vm1576 = vcmp.eq.s32.totalorder %v1429, %v1572
    %vm1577 = vcmp.eq.s32.totalorder %v1430, %v1572
    %vm1578 = vcmp.eq.s32.totalorder %v1431, %v1572
    %vm1579 = vcmp.eq.s32.totalorder %v1432, %v1572
    %vm1580 = vcmp.eq.s32.totalorder %v1433, %v1572
    %vm1581 = vcmp.eq.s32.totalorder %v1434, %v1572
    %vm1582 = vcmp.eq.s32.totalorder %v1435, %v1572
    %vm1583 = vcmp.eq.s32.totalorder %v1436, %v1572
    %vm1584 = vcmp.eq.s32.totalorder %v1437, %v1572
    %vm1585 = vcmp.eq.s32.totalorder %v1438, %v1572
    %vm1586 = vcmp.eq.s32.totalorder %v1439, %v1572
    %vm1587 = vcmp.eq.s32.totalorder %v1440, %v1572
    %vm1588 = vcmp.eq.s32.totalorder %v1441, %v1572
    %v1589 = vsel %vm1573, %v1361, 0.0
    %v1590 = vsel %vm1574, %v1362, 0.0
    %v1591 = vsel %vm1575, %v1363, 0.0
    %v1592 = vsel %vm1576, %v1364, 0.0
    %v1593 = vsel %vm1577, %v1365, 0.0
    %v1594 = vsel %vm1578, %v1366, 0.0
    %v1595 = vsel %vm1579, %v1367, 0.0
    %v1596 = vsel %vm1580, %v1368, 0.0
    %v1597 = vsel %vm1581, %v1369, 0.0
    %v1598 = vsel %vm1582, %v1370, 0.0
    %v1599 = vsel %vm1583, %v1371, 0.0
    %v1600 = vsel %vm1584, %v1372, 0.0
    %v1601 = vsel %vm1585, %v1373, 0.0
    %v1602 = vsel %vm1586, %v1374, 0.0
    %v1603 = vsel %vm1587, %v1375, 0.0
    %v1604 = vsel %vm1588, %v1376, 0.0
    %v1605 = vsel %vm1443, %v1589, 0.0
    %v1606 = vsel %vm1443, %v1590, 0.0
    %v1607 = vadd.f32 %v1605, %v1606
    %v1608 = vsel %vm1443, %v1591, 0.0
    %v1609 = vadd.f32 %v1607, %v1608
    %v1610 = vsel %vm1443, %v1592, 0.0
    %v1611 = vadd.f32 %v1609, %v1610
    %v1612 = vsel %vm1443, %v1593, 0.0
    %v1613 = vadd.f32 %v1611, %v1612
    %v1614 = vsel %vm1443, %v1594, 0.0
    %v1615 = vadd.f32 %v1613, %v1614
    %v1616 = vsel %vm1443, %v1595, 0.0
    %v1617 = vadd.f32 %v1615, %v1616
    %v1618 = vsel %vm1443, %v1596, 0.0
    %v1619 = vadd.f32 %v1617, %v1618
    %v1620 = vsel %vm1443, %v1597, 0.0
    %v1621 = vadd.f32 %v1619, %v1620
    %v1622 = vsel %vm1443, %v1598, 0.0
    %v1623 = vadd.f32 %v1621, %v1622
    %v1624 = vsel %vm1443, %v1599, 0.0
    %v1625 = vadd.f32 %v1623, %v1624
    %v1626 = vsel %vm1443, %v1600, 0.0
    %v1627 = vadd.f32 %v1625, %v1626
    %v1628 = vsel %vm1443, %v1601, 0.0
    %v1629 = vadd.f32 %v1627, %v1628
    %v1630 = vsel %vm1443, %v1602, 0.0
    %v1631 = vadd.f32 %v1629, %v1630
    %v1632 = vsel %vm1443, %v1603, 0.0
    %v1633 = vadd.f32 %v1631, %v1632
    %v1634 = vsel %vm1443, %v1604, 0.0
    %v1635 = vadd.f32 %v1633, %v1634
    %v1636 = vrot.slane %v1635, 4
    %v1637 = vadd.f32 %v1635, %v1636
    %v1638 = vrot.slane %v1637, 2
    %v1639 = vadd.f32 %v1637, %v1638
    %v1640 = vrot.slane %v1639, 1
    %v1641 = vadd.f32 %v1639, %v1640
    %vm1642 = vcmp.ge.f32.partialorder %v1361, %v1480
    %vm1643 = vcmp.ge.f32.partialorder %v1362, %v1480
    %vm1644 = vcmp.ge.f32.partialorder %v1363, %v1480
    %vm1645 = vcmp.ge.f32.partialorder %v1364, %v1480
    %vm1646 = vcmp.ge.f32.partialorder %v1365, %v1480
    %vm1647 = vcmp.ge.f32.partialorder %v1366, %v1480
    %vm1648 = vcmp.ge.f32.partialorder %v1367, %v1480
    %vm1649 = vcmp.ge.f32.partialorder %v1368, %v1480
    %vm1650 = vcmp.ge.f32.partialorder %v1369, %v1480
    %vm1651 = vcmp.ge.f32.partialorder %v1370, %v1480
    %vm1652 = vcmp.ge.f32.partialorder %v1371, %v1480
    %vm1653 = vcmp.ge.f32.partialorder %v1372, %v1480
    %vm1654 = vcmp.ge.f32.partialorder %v1373, %v1480
    %vm1655 = vcmp.ge.f32.partialorder %v1374, %v1480
    %vm1656 = vcmp.ge.f32.partialorder %v1375, %v1480
    %vm1657 = vcmp.ge.f32.partialorder %v1376, %v1480
    %v1658 = vsel %vm1642, %v1426, 128
    %v1659 = vsel %vm1643, %v1427, 128
    %v1660 = vsel %vm1644, %v1428, 128
    %v1661 = vsel %vm1645, %v1429, 128
    %v1662 = vsel %vm1646, %v1430, 128
    %v1663 = vsel %vm1647, %v1431, 128
    %v1664 = vsel %vm1648, %v1432, 128
    %v1665 = vsel %vm1649, %v1433, 128
    %v1666 = vsel %vm1650, %v1434, 128
    %v1667 = vsel %vm1651, %v1435, 128
    %v1668 = vsel %vm1652, %v1436, 128
    %v1669 = vsel %vm1653, %v1437, 128
    %v1670 = vsel %vm1654, %v1438, 128
    %v1671 = vsel %vm1655, %v1439, 128
    %v1672 = vsel %vm1656, %v1440, 128
    %v1673 = vsel %vm1657, %v1441, 128
    %v1674 = vsel %vm1443, %v1658, 2147483647
    %v1675 = vsel %vm1443, %v1659, 2147483647
    %v1676 = vsel %vm1443, %v1660, 2147483647
    %v1677 = vsel %vm1443, %v1661, 2147483647
    %v1678 = vsel %vm1443, %v1662, 2147483647
    %vm1679 = vcmp.lt.s32.totalorder %v1674, %v1678
    %v1680 = vsel %vm1679, %v1674, %v1678
    %v1681 = vsel %vm1443, %v1663, 2147483647
    %vm1682 = vcmp.lt.s32.totalorder %v1675, %v1681
    %v1683 = vsel %vm1682, %v1675, %v1681
    %v1684 = vsel %vm1443, %v1664, 2147483647
    %vm1685 = vcmp.lt.s32.totalorder %v1676, %v1684
    %v1686 = vsel %vm1685, %v1676, %v1684
    %v1687 = vsel %vm1443, %v1665, 2147483647
    %vm1688 = vcmp.lt.s32.totalorder %v1677, %v1687
    %v1689 = vsel %vm1688, %v1677, %v1687
    %v1690 = vsel %vm1443, %v1666, 2147483647
    %vm1691 = vcmp.lt.s32.totalorder %v1680, %v1690
    %v1692 = vsel %vm1691, %v1680, %v1690
    %v1693 = vsel %vm1443, %v1667, 2147483647
    %vm1694 = vcmp.lt.s32.totalorder %v1683, %v1693
    %v1695 = vsel %vm1694, %v1683, %v1693
    %v1696 = vsel %vm1443, %v1668, 2147483647
    %vm1697 = vcmp.lt.s32.totalorder %v1686, %v1696
    %v1698 = vsel %vm1697, %v1686, %v1696
    %v1699 = vsel %vm1443, %v1669, 2147483647
    %vm1700 = vcmp.lt.s32.totalorder %v1689, %v1699
    %v1701 = vsel %vm1700, %v1689, %v1699
    %v1702 = vsel %vm1443, %v1670, 2147483647
    %vm1703 = vcmp.lt.s32.totalorder %v1692, %v1702
    %v1704 = vsel %vm1703, %v1692, %v1702
    %v1705 = vsel %vm1443, %v1671, 2147483647
    %vm1706 = vcmp.lt.s32.totalorder %v1695, %v1705
    %v1707 = vsel %vm1706, %v1695, %v1705
    %v1708 = vsel %vm1443, %v1672, 2147483647
    %vm1709 = vcmp.lt.s32.totalorder %v1698, %v1708
    %v1710 = vsel %vm1709, %v1698, %v1708
    %v1711 = vsel %vm1443, %v1673, 2147483647
    %vm1712 = vcmp.lt.s32.totalorder %v1701, %v1711
    %v1713 = vsel %vm1712, %v1701, %v1711
    %vm1714 = vcmp.lt.s32.totalorder %v1704, %v1707
    %v1715 = vsel %vm1714, %v1704, %v1707
    %vm1716 = vcmp.lt.s32.totalorder %v1710, %v1713
    %v1717 = vsel %vm1716, %v1710, %v1713
    %vm1718 = vcmp.lt.s32.totalorder %v1715, %v1717
    %v1719 = vsel %vm1718, %v1715, %v1717
    %v1720 = vrot.slane %v1719, 4
    %vm1721 = vcmp.lt.s32.totalorder %v1719, %v1720
    %v1722 = vsel %vm1721, %v1719, %v1720
    %v1723 = vrot.slane %v1722, 2
    %vm1724 = vcmp.lt.s32.totalorder %v1722, %v1723
    %v1725 = vsel %vm1724, %v1722, %v1723
    %v1726 = vrot.slane %v1725, 1
    %vm1727 = vcmp.lt.s32.totalorder %v1725, %v1726
    %v1728 = vsel %vm1727, %v1725, %v1726
    %v1729 = vsub.f32 %v1568, %v1641
    %vm1730 = vcmask 57344
    %1731 = vst.msk [vmem:[%s7] sm:$0x1] %vm1730, %v1729
    %vm1732 = vcmp.eq.s32.totalorder %v1728, %v1442
    %v1733 = vsel %vm1732, 1, 0
    %v1734 = vcvt.s32.f32 %v1733
    %1735 = vst.msk [vmem:[%s8] sm:$0x1] %vm1730, %v1734
    %v1736 = vld [vmem:[%s0 + $0x1] sm:$0x1]
    %v1737 = vsel %vm1443, %v1377, -inf
    %v1738 = vsel %vm1443, %v1378, -inf
    %v1739 = vsel %vm1443, %v1379, -inf
    %v1740 = vsel %vm1443, %v1380, -inf
    %v1741 = vsel %vm1443, %v1381, -inf
    %v1742 = vmax.f32 %v1737, %v1741
    %v1743 = vsel %vm1443, %v1382, -inf
    %v1744 = vmax.f32 %v1738, %v1743
    %v1745 = vsel %vm1443, %v1383, -inf
    %v1746 = vmax.f32 %v1739, %v1745
    %v1747 = vsel %vm1443, %v1384, -inf
    %v1748 = vmax.f32 %v1740, %v1747
    %v1749 = vsel %vm1443, %v1385, -inf
    %v1750 = vmax.f32 %v1742, %v1749
    %v1751 = vsel %vm1443, %v1386, -inf
    %v1752 = vmax.f32 %v1744, %v1751
    %v1753 = vsel %vm1443, %v1387, -inf
    %v1754 = vmax.f32 %v1746, %v1753
    %v1755 = vsel %vm1443, %v1388, -inf
    %v1756 = vmax.f32 %v1748, %v1755
    %v1757 = vsel %vm1443, %v1389, -inf
    %v1758 = vmax.f32 %v1750, %v1757
    %v1759 = vsel %vm1443, %v1390, -inf
    %v1760 = vmax.f32 %v1752, %v1759
    %v1761 = vsel %vm1443, %v1391, -inf
    %v1762 = vmax.f32 %v1754, %v1761
    %v1763 = vsel %vm1443, %v1392, -inf
    %v1764 = vmax.f32 %v1756, %v1763
    %v1765 = vmax.f32 %v1758, %v1760
    %v1766 = vmax.f32 %v1762, %v1764
    %v1767 = vmax.f32 %v1765, %v1766
    %v1768 = vrot.slane %v1767, 4
    %v1769 = vmax.f32 %v1767, %v1768
    %v1770 = vrot.slane %v1769, 2
    %v1771 = vmax.f32 %v1769, %v1770
    %v1772 = vrot.slane %v1771, 1
    %v1773 = vmax.f32 %v1771, %v1772
    %v1774 = vsub.f32 %v1377, %v1773
    %v1775 = vsub.f32 %v1378, %v1773
    %v1776 = vsub.f32 %v1379, %v1773
    %v1777 = vsub.f32 %v1380, %v1773
    %v1778 = vsub.f32 %v1381, %v1773
    %v1779 = vsub.f32 %v1382, %v1773
    %v1780 = vsub.f32 %v1383, %v1773
    %v1781 = vsub.f32 %v1384, %v1773
    %v1782 = vsub.f32 %v1385, %v1773
    %v1783 = vsub.f32 %v1386, %v1773
    %v1784 = vsub.f32 %v1387, %v1773
    %v1785 = vsub.f32 %v1388, %v1773
    %v1786 = vsub.f32 %v1389, %v1773
    %v1787 = vsub.f32 %v1390, %v1773
    %v1788 = vsub.f32 %v1391, %v1773
    %v1789 = vsub.f32 %v1392, %v1773
    %v1790 = vmul.f32 %v1774, 1.442695
    %v1791 = vpow.pop %v1790
    %v1792 = vmul.f32 %v1775, 1.442695
    %v1793 = vpow.pop %v1792
    %v1794 = vmul.f32 %v1776, 1.442695
    %v1795 = vpow.pop %v1794
    %v1796 = vmul.f32 %v1777, 1.442695
    %v1797 = vpow.pop %v1796
    %v1798 = vmul.f32 %v1778, 1.442695
    %v1799 = vpow.pop %v1798
    %v1800 = vmul.f32 %v1779, 1.442695
    %v1801 = vpow.pop %v1800
    %v1802 = vmul.f32 %v1780, 1.442695
    %v1803 = vpow.pop %v1802
    %v1804 = vmul.f32 %v1781, 1.442695
    %v1805 = vpow.pop %v1804
    %v1806 = vmul.f32 %v1782, 1.442695
    %v1807 = vpow.pop %v1806
    %v1808 = vmul.f32 %v1783, 1.442695
    %v1809 = vpow.pop %v1808
    %v1810 = vmul.f32 %v1784, 1.442695
    %v1811 = vpow.pop %v1810
    %v1812 = vmul.f32 %v1785, 1.442695
    %v1813 = vpow.pop %v1812
    %v1814 = vmul.f32 %v1786, 1.442695
    %v1815 = vpow.pop %v1814
    %v1816 = vmul.f32 %v1787, 1.442695
    %v1817 = vpow.pop %v1816
    %v1818 = vmul.f32 %v1788, 1.442695
    %v1819 = vpow.pop %v1818
    %v1820 = vmul.f32 %v1789, 1.442695
    %v1821 = vpow.pop %v1820
    %v1822 = vsel %vm1443, %v1791, 0.0
    %v1823 = vsel %vm1443, %v1793, 0.0
    %v1824 = vadd.f32 %v1822, %v1823
    %v1825 = vsel %vm1443, %v1795, 0.0
    %v1826 = vadd.f32 %v1824, %v1825
    %v1827 = vsel %vm1443, %v1797, 0.0
    %v1828 = vadd.f32 %v1826, %v1827
    %v1829 = vsel %vm1443, %v1799, 0.0
    %v1830 = vadd.f32 %v1828, %v1829
    %v1831 = vsel %vm1443, %v1801, 0.0
    %v1832 = vadd.f32 %v1830, %v1831
    %v1833 = vsel %vm1443, %v1803, 0.0
    %v1834 = vadd.f32 %v1832, %v1833
    %v1835 = vsel %vm1443, %v1805, 0.0
    %v1836 = vadd.f32 %v1834, %v1835
    %v1837 = vsel %vm1443, %v1807, 0.0
    %v1838 = vadd.f32 %v1836, %v1837
    %v1839 = vsel %vm1443, %v1809, 0.0
    %v1840 = vadd.f32 %v1838, %v1839
    %v1841 = vsel %vm1443, %v1811, 0.0
    %v1842 = vadd.f32 %v1840, %v1841
    %v1843 = vsel %vm1443, %v1813, 0.0
    %v1844 = vadd.f32 %v1842, %v1843
    %v1845 = vsel %vm1443, %v1815, 0.0
    %v1846 = vadd.f32 %v1844, %v1845
    %v1847 = vsel %vm1443, %v1817, 0.0
    %v1848 = vadd.f32 %v1846, %v1847
    %v1849 = vsel %vm1443, %v1819, 0.0
    %v1850 = vadd.f32 %v1848, %v1849
    %v1851 = vsel %vm1443, %v1821, 0.0
    %v1852 = vadd.f32 %v1850, %v1851
    %v1853 = vrot.slane %v1852, 4
    %v1854 = vadd.f32 %v1852, %v1853
    %v1855 = vrot.slane %v1854, 2
    %v1856 = vadd.f32 %v1854, %v1855
    %v1857 = vrot.slane %v1856, 1
    %v1858 = vadd.f32 %v1856, %v1857
    %v1859 = vlog2.pop %v1858
    %v1860 = vmul.f32 %v1859, 0.6931472
    %v1861 = vadd.f32 %v1773, %v1860
    %v1862 = vlaneseq
    %v1863 = vshrl.u32 %v1862, 7
    %v1864 = vsub.s32 0, %v1863
    %v1865 = vrot.slane %v1736, %v1864
    %vm1866 = vcmp.eq.s32.totalorder %v1426, %v1865
    %vm1867 = vcmp.eq.s32.totalorder %v1427, %v1865
    %vm1868 = vcmp.eq.s32.totalorder %v1428, %v1865
    %vm1869 = vcmp.eq.s32.totalorder %v1429, %v1865
    %vm1870 = vcmp.eq.s32.totalorder %v1430, %v1865
    %vm1871 = vcmp.eq.s32.totalorder %v1431, %v1865
    %vm1872 = vcmp.eq.s32.totalorder %v1432, %v1865
    %vm1873 = vcmp.eq.s32.totalorder %v1433, %v1865
    %vm1874 = vcmp.eq.s32.totalorder %v1434, %v1865
    %vm1875 = vcmp.eq.s32.totalorder %v1435, %v1865
    %vm1876 = vcmp.eq.s32.totalorder %v1436, %v1865
    %vm1877 = vcmp.eq.s32.totalorder %v1437, %v1865
    %vm1878 = vcmp.eq.s32.totalorder %v1438, %v1865
    %vm1879 = vcmp.eq.s32.totalorder %v1439, %v1865
    %vm1880 = vcmp.eq.s32.totalorder %v1440, %v1865
    %vm1881 = vcmp.eq.s32.totalorder %v1441, %v1865
    %v1882 = vsel %vm1866, %v1377, 0.0
    %v1883 = vsel %vm1867, %v1378, 0.0
    %v1884 = vsel %vm1868, %v1379, 0.0
    %v1885 = vsel %vm1869, %v1380, 0.0
    %v1886 = vsel %vm1870, %v1381, 0.0
    %v1887 = vsel %vm1871, %v1382, 0.0
    %v1888 = vsel %vm1872, %v1383, 0.0
    %v1889 = vsel %vm1873, %v1384, 0.0
    %v1890 = vsel %vm1874, %v1385, 0.0
    %v1891 = vsel %vm1875, %v1386, 0.0
    %v1892 = vsel %vm1876, %v1387, 0.0
    %v1893 = vsel %vm1877, %v1388, 0.0
    %v1894 = vsel %vm1878, %v1389, 0.0
    %v1895 = vsel %vm1879, %v1390, 0.0
    %v1896 = vsel %vm1880, %v1391, 0.0
    %v1897 = vsel %vm1881, %v1392, 0.0
    %v1898 = vsel %vm1443, %v1882, 0.0
    %v1899 = vsel %vm1443, %v1883, 0.0
    %v1900 = vadd.f32 %v1898, %v1899
    %v1901 = vsel %vm1443, %v1884, 0.0
    %v1902 = vadd.f32 %v1900, %v1901
    %v1903 = vsel %vm1443, %v1885, 0.0
    %v1904 = vadd.f32 %v1902, %v1903
    %v1905 = vsel %vm1443, %v1886, 0.0
    %v1906 = vadd.f32 %v1904, %v1905
    %v1907 = vsel %vm1443, %v1887, 0.0
    %v1908 = vadd.f32 %v1906, %v1907
    %v1909 = vsel %vm1443, %v1888, 0.0
    %v1910 = vadd.f32 %v1908, %v1909
    %v1911 = vsel %vm1443, %v1889, 0.0
    %v1912 = vadd.f32 %v1910, %v1911
    %v1913 = vsel %vm1443, %v1890, 0.0
    %v1914 = vadd.f32 %v1912, %v1913
    %v1915 = vsel %vm1443, %v1891, 0.0
    %v1916 = vadd.f32 %v1914, %v1915
    %v1917 = vsel %vm1443, %v1892, 0.0
    %v1918 = vadd.f32 %v1916, %v1917
    %v1919 = vsel %vm1443, %v1893, 0.0
    %v1920 = vadd.f32 %v1918, %v1919
    %v1921 = vsel %vm1443, %v1894, 0.0
    %v1922 = vadd.f32 %v1920, %v1921
    %v1923 = vsel %vm1443, %v1895, 0.0
    %v1924 = vadd.f32 %v1922, %v1923
    %v1925 = vsel %vm1443, %v1896, 0.0
    %v1926 = vadd.f32 %v1924, %v1925
    %v1927 = vsel %vm1443, %v1897, 0.0
    %v1928 = vadd.f32 %v1926, %v1927
    %v1929 = vrot.slane %v1928, 4
    %v1930 = vadd.f32 %v1928, %v1929
    %v1931 = vrot.slane %v1930, 2
    %v1932 = vadd.f32 %v1930, %v1931
    %v1933 = vrot.slane %v1932, 1
    %v1934 = vadd.f32 %v1932, %v1933
    %vm1935 = vcmp.ge.f32.partialorder %v1377, %v1773
    %vm1936 = vcmp.ge.f32.partialorder %v1378, %v1773
    %vm1937 = vcmp.ge.f32.partialorder %v1379, %v1773
    %vm1938 = vcmp.ge.f32.partialorder %v1380, %v1773
    %vm1939 = vcmp.ge.f32.partialorder %v1381, %v1773
    %vm1940 = vcmp.ge.f32.partialorder %v1382, %v1773
    %vm1941 = vcmp.ge.f32.partialorder %v1383, %v1773
    %vm1942 = vcmp.ge.f32.partialorder %v1384, %v1773
    %vm1943 = vcmp.ge.f32.partialorder %v1385, %v1773
    %vm1944 = vcmp.ge.f32.partialorder %v1386, %v1773
    %vm1945 = vcmp.ge.f32.partialorder %v1387, %v1773
    %vm1946 = vcmp.ge.f32.partialorder %v1388, %v1773
    %vm1947 = vcmp.ge.f32.partialorder %v1389, %v1773
    %vm1948 = vcmp.ge.f32.partialorder %v1390, %v1773
    %vm1949 = vcmp.ge.f32.partialorder %v1391, %v1773
    %vm1950 = vcmp.ge.f32.partialorder %v1392, %v1773
    %v1951 = vsel %vm1935, %v1426, 128
    %v1952 = vsel %vm1936, %v1427, 128
    %v1953 = vsel %vm1937, %v1428, 128
    %v1954 = vsel %vm1938, %v1429, 128
    %v1955 = vsel %vm1939, %v1430, 128
    %v1956 = vsel %vm1940, %v1431, 128
    %v1957 = vsel %vm1941, %v1432, 128
    %v1958 = vsel %vm1942, %v1433, 128
    %v1959 = vsel %vm1943, %v1434, 128
    %v1960 = vsel %vm1944, %v1435, 128
    %v1961 = vsel %vm1945, %v1436, 128
    %v1962 = vsel %vm1946, %v1437, 128
    %v1963 = vsel %vm1947, %v1438, 128
    %v1964 = vsel %vm1948, %v1439, 128
    %v1965 = vsel %vm1949, %v1440, 128
    %v1966 = vsel %vm1950, %v1441, 128
    %v1967 = vsel %vm1443, %v1951, 2147483647
    %v1968 = vsel %vm1443, %v1952, 2147483647
    %v1969 = vsel %vm1443, %v1953, 2147483647
    %v1970 = vsel %vm1443, %v1954, 2147483647
    %v1971 = vsel %vm1443, %v1955, 2147483647
    %vm1972 = vcmp.lt.s32.totalorder %v1967, %v1971
    %v1973 = vsel %vm1972, %v1967, %v1971
    %v1974 = vsel %vm1443, %v1956, 2147483647
    %vm1975 = vcmp.lt.s32.totalorder %v1968, %v1974
    %v1976 = vsel %vm1975, %v1968, %v1974
    %v1977 = vsel %vm1443, %v1957, 2147483647
    %vm1978 = vcmp.lt.s32.totalorder %v1969, %v1977
    %v1979 = vsel %vm1978, %v1969, %v1977
    %v1980 = vsel %vm1443, %v1958, 2147483647
    %vm1981 = vcmp.lt.s32.totalorder %v1970, %v1980
    %v1982 = vsel %vm1981, %v1970, %v1980
    %v1983 = vsel %vm1443, %v1959, 2147483647
    %vm1984 = vcmp.lt.s32.totalorder %v1973, %v1983
    %v1985 = vsel %vm1984, %v1973, %v1983
    %v1986 = vsel %vm1443, %v1960, 2147483647
    %vm1987 = vcmp.lt.s32.totalorder %v1976, %v1986
    %v1988 = vsel %vm1987, %v1976, %v1986
    %v1989 = vsel %vm1443, %v1961, 2147483647
    %vm1990 = vcmp.lt.s32.totalorder %v1979, %v1989
    %v1991 = vsel %vm1990, %v1979, %v1989
    %v1992 = vsel %vm1443, %v1962, 2147483647
    %vm1993 = vcmp.lt.s32.totalorder %v1982, %v1992
    %v1994 = vsel %vm1993, %v1982, %v1992
    %v1995 = vsel %vm1443, %v1963, 2147483647
    %vm1996 = vcmp.lt.s32.totalorder %v1985, %v1995
    %v1997 = vsel %vm1996, %v1985, %v1995
    %v1998 = vsel %vm1443, %v1964, 2147483647
    %vm1999 = vcmp.lt.s32.totalorder %v1988, %v1998
    %v2000 = vsel %vm1999, %v1988, %v1998
    %v2001 = vsel %vm1443, %v1965, 2147483647
    %vm2002 = vcmp.lt.s32.totalorder %v1991, %v2001
    %v2003 = vsel %vm2002, %v1991, %v2001
    %v2004 = vsel %vm1443, %v1966, 2147483647
    %vm2005 = vcmp.lt.s32.totalorder %v1994, %v2004
    %v2006 = vsel %vm2005, %v1994, %v2004
    %vm2007 = vcmp.lt.s32.totalorder %v1997, %v2000
    %v2008 = vsel %vm2007, %v1997, %v2000
    %vm2009 = vcmp.lt.s32.totalorder %v2003, %v2006
    %v2010 = vsel %vm2009, %v2003, %v2006
    %vm2011 = vcmp.lt.s32.totalorder %v2008, %v2010
    %v2012 = vsel %vm2011, %v2008, %v2010
    %v2013 = vrot.slane %v2012, 4
    %vm2014 = vcmp.lt.s32.totalorder %v2012, %v2013
    %v2015 = vsel %vm2014, %v2012, %v2013
    %v2016 = vrot.slane %v2015, 2
    %vm2017 = vcmp.lt.s32.totalorder %v2015, %v2016
    %v2018 = vsel %vm2017, %v2015, %v2016
    %v2019 = vrot.slane %v2018, 1
    %vm2020 = vcmp.lt.s32.totalorder %v2018, %v2019
    %v2021 = vsel %vm2020, %v2018, %v2019
    %v2022 = vsub.f32 %v1861, %v1934
    %2023 = vst.msk [vmem:[%s7 + $0x1] sm:$0x1] %vm1730, %v2022
    %vm2024 = vcmp.eq.s32.totalorder %v2021, %v1736
    %v2025 = vsel %vm2024, 1, 0
    %v2026 = vcvt.s32.f32 %v2025
    %2027 = vst.msk [vmem:[%s8 + $0x1] sm:$0x1] %vm1730, %v2026
    %v2028 = vld [vmem:[%s0 + $0x2] sm:$0x1]
    %v2029 = vsel %vm1443, %v1393, -inf
    %v2030 = vsel %vm1443, %v1394, -inf
    %v2031 = vsel %vm1443, %v1395, -inf
    %v2032 = vsel %vm1443, %v1396, -inf
    %v2033 = vsel %vm1443, %v1397, -inf
    %v2034 = vmax.f32 %v2029, %v2033
    %v2035 = vsel %vm1443, %v1398, -inf
    %v2036 = vmax.f32 %v2030, %v2035
    %v2037 = vsel %vm1443, %v1399, -inf
    %v2038 = vmax.f32 %v2031, %v2037
    %v2039 = vsel %vm1443, %v1400, -inf
    %v2040 = vmax.f32 %v2032, %v2039
    %v2041 = vsel %vm1443, %v1401, -inf
    %v2042 = vmax.f32 %v2034, %v2041
    %v2043 = vsel %vm1443, %v1402, -inf
    %v2044 = vmax.f32 %v2036, %v2043
    %v2045 = vsel %vm1443, %v1403, -inf
    %v2046 = vmax.f32 %v2038, %v2045
    %v2047 = vsel %vm1443, %v1404, -inf
    %v2048 = vmax.f32 %v2040, %v2047
    %v2049 = vsel %vm1443, %v1405, -inf
    %v2050 = vmax.f32 %v2042, %v2049
    %v2051 = vsel %vm1443, %v1406, -inf
    %v2052 = vmax.f32 %v2044, %v2051
    %v2053 = vsel %vm1443, %v1407, -inf
    %v2054 = vmax.f32 %v2046, %v2053
    %v2055 = vsel %vm1443, %v1408, -inf
    %v2056 = vmax.f32 %v2048, %v2055
    %v2057 = vmax.f32 %v2050, %v2052
    %v2058 = vmax.f32 %v2054, %v2056
    %v2059 = vmax.f32 %v2057, %v2058
    %v2060 = vrot.slane %v2059, 4
    %v2061 = vmax.f32 %v2059, %v2060
    %v2062 = vrot.slane %v2061, 2
    %v2063 = vmax.f32 %v2061, %v2062
    %v2064 = vrot.slane %v2063, 1
    %v2065 = vmax.f32 %v2063, %v2064
    %v2066 = vsub.f32 %v1393, %v2065
    %v2067 = vsub.f32 %v1394, %v2065
    %v2068 = vsub.f32 %v1395, %v2065
    %v2069 = vsub.f32 %v1396, %v2065
    %v2070 = vsub.f32 %v1397, %v2065
    %v2071 = vsub.f32 %v1398, %v2065
    %v2072 = vsub.f32 %v1399, %v2065
    %v2073 = vsub.f32 %v1400, %v2065
    %v2074 = vsub.f32 %v1401, %v2065
    %v2075 = vsub.f32 %v1402, %v2065
    %v2076 = vsub.f32 %v1403, %v2065
    %v2077 = vsub.f32 %v1404, %v2065
    %v2078 = vsub.f32 %v1405, %v2065
    %v2079 = vsub.f32 %v1406, %v2065
    %v2080 = vsub.f32 %v1407, %v2065
    %v2081 = vsub.f32 %v1408, %v2065
    %v2082 = vmul.f32 %v2066, 1.442695
    %v2083 = vpow.pop %v2082
    %v2084 = vmul.f32 %v2067, 1.442695
    %v2085 = vpow.pop %v2084
    %v2086 = vmul.f32 %v2068, 1.442695
    %v2087 = vpow.pop %v2086
    %v2088 = vmul.f32 %v2069, 1.442695
    %v2089 = vpow.pop %v2088
    %v2090 = vmul.f32 %v2070, 1.442695
    %v2091 = vpow.pop %v2090
    %v2092 = vmul.f32 %v2071, 1.442695
    %v2093 = vpow.pop %v2092
    %v2094 = vmul.f32 %v2072, 1.442695
    %v2095 = vpow.pop %v2094
    %v2096 = vmul.f32 %v2073, 1.442695
    %v2097 = vpow.pop %v2096
    %v2098 = vmul.f32 %v2074, 1.442695
    %v2099 = vpow.pop %v2098
    %v2100 = vmul.f32 %v2075, 1.442695
    %v2101 = vpow.pop %v2100
    %v2102 = vmul.f32 %v2076, 1.442695
    %v2103 = vpow.pop %v2102
    %v2104 = vmul.f32 %v2077, 1.442695
    %v2105 = vpow.pop %v2104
    %v2106 = vmul.f32 %v2078, 1.442695
    %v2107 = vpow.pop %v2106
    %v2108 = vmul.f32 %v2079, 1.442695
    %v2109 = vpow.pop %v2108
    %v2110 = vmul.f32 %v2080, 1.442695
    %v2111 = vpow.pop %v2110
    %v2112 = vmul.f32 %v2081, 1.442695
    %v2113 = vpow.pop %v2112
    %v2114 = vsel %vm1443, %v2083, 0.0
    %v2115 = vsel %vm1443, %v2085, 0.0
    %v2116 = vadd.f32 %v2114, %v2115
    %v2117 = vsel %vm1443, %v2087, 0.0
    %v2118 = vadd.f32 %v2116, %v2117
    %v2119 = vsel %vm1443, %v2089, 0.0
    %v2120 = vadd.f32 %v2118, %v2119
    %v2121 = vsel %vm1443, %v2091, 0.0
    %v2122 = vadd.f32 %v2120, %v2121
    %v2123 = vsel %vm1443, %v2093, 0.0
    %v2124 = vadd.f32 %v2122, %v2123
    %v2125 = vsel %vm1443, %v2095, 0.0
    %v2126 = vadd.f32 %v2124, %v2125
    %v2127 = vsel %vm1443, %v2097, 0.0
    %v2128 = vadd.f32 %v2126, %v2127
    %v2129 = vsel %vm1443, %v2099, 0.0
    %v2130 = vadd.f32 %v2128, %v2129
    %v2131 = vsel %vm1443, %v2101, 0.0
    %v2132 = vadd.f32 %v2130, %v2131
    %v2133 = vsel %vm1443, %v2103, 0.0
    %v2134 = vadd.f32 %v2132, %v2133
    %v2135 = vsel %vm1443, %v2105, 0.0
    %v2136 = vadd.f32 %v2134, %v2135
    %v2137 = vsel %vm1443, %v2107, 0.0
    %v2138 = vadd.f32 %v2136, %v2137
    %v2139 = vsel %vm1443, %v2109, 0.0
    %v2140 = vadd.f32 %v2138, %v2139
    %v2141 = vsel %vm1443, %v2111, 0.0
    %v2142 = vadd.f32 %v2140, %v2141
    %v2143 = vsel %vm1443, %v2113, 0.0
    %v2144 = vadd.f32 %v2142, %v2143
    %v2145 = vrot.slane %v2144, 4
    %v2146 = vadd.f32 %v2144, %v2145
    %v2147 = vrot.slane %v2146, 2
    %v2148 = vadd.f32 %v2146, %v2147
    %v2149 = vrot.slane %v2148, 1
    %v2150 = vadd.f32 %v2148, %v2149
    %v2151 = vlog2.pop %v2150
    %v2152 = vmul.f32 %v2151, 0.6931472
    %v2153 = vadd.f32 %v2065, %v2152
    %v2154 = vlaneseq
    %v2155 = vshrl.u32 %v2154, 7
    %v2156 = vsub.s32 0, %v2155
    %v2157 = vrot.slane %v2028, %v2156
    %vm2158 = vcmp.eq.s32.totalorder %v1426, %v2157
    %vm2159 = vcmp.eq.s32.totalorder %v1427, %v2157
    %vm2160 = vcmp.eq.s32.totalorder %v1428, %v2157
    %vm2161 = vcmp.eq.s32.totalorder %v1429, %v2157
    %vm2162 = vcmp.eq.s32.totalorder %v1430, %v2157
    %vm2163 = vcmp.eq.s32.totalorder %v1431, %v2157
    %vm2164 = vcmp.eq.s32.totalorder %v1432, %v2157
    %vm2165 = vcmp.eq.s32.totalorder %v1433, %v2157
    %vm2166 = vcmp.eq.s32.totalorder %v1434, %v2157
    %vm2167 = vcmp.eq.s32.totalorder %v1435, %v2157
    %vm2168 = vcmp.eq.s32.totalorder %v1436, %v2157
    %vm2169 = vcmp.eq.s32.totalorder %v1437, %v2157
    %vm2170 = vcmp.eq.s32.totalorder %v1438, %v2157
    %vm2171 = vcmp.eq.s32.totalorder %v1439, %v2157
    %vm2172 = vcmp.eq.s32.totalorder %v1440, %v2157
    %vm2173 = vcmp.eq.s32.totalorder %v1441, %v2157
    %v2174 = vsel %vm2158, %v1393, 0.0
    %v2175 = vsel %vm2159, %v1394, 0.0
    %v2176 = vsel %vm2160, %v1395, 0.0
    %v2177 = vsel %vm2161, %v1396, 0.0
    %v2178 = vsel %vm2162, %v1397, 0.0
    %v2179 = vsel %vm2163, %v1398, 0.0
    %v2180 = vsel %vm2164, %v1399, 0.0
    %v2181 = vsel %vm2165, %v1400, 0.0
    %v2182 = vsel %vm2166, %v1401, 0.0
    %v2183 = vsel %vm2167, %v1402, 0.0
    %v2184 = vsel %vm2168, %v1403, 0.0
    %v2185 = vsel %vm2169, %v1404, 0.0
    %v2186 = vsel %vm2170, %v1405, 0.0
    %v2187 = vsel %vm2171, %v1406, 0.0
    %v2188 = vsel %vm2172, %v1407, 0.0
    %v2189 = vsel %vm2173, %v1408, 0.0
    %v2190 = vsel %vm1443, %v2174, 0.0
    %v2191 = vsel %vm1443, %v2175, 0.0
    %v2192 = vadd.f32 %v2190, %v2191
    %v2193 = vsel %vm1443, %v2176, 0.0
    %v2194 = vadd.f32 %v2192, %v2193
    %v2195 = vsel %vm1443, %v2177, 0.0
    %v2196 = vadd.f32 %v2194, %v2195
    %v2197 = vsel %vm1443, %v2178, 0.0
    %v2198 = vadd.f32 %v2196, %v2197
    %v2199 = vsel %vm1443, %v2179, 0.0
    %v2200 = vadd.f32 %v2198, %v2199
    %v2201 = vsel %vm1443, %v2180, 0.0
    %v2202 = vadd.f32 %v2200, %v2201
    %v2203 = vsel %vm1443, %v2181, 0.0
    %v2204 = vadd.f32 %v2202, %v2203
    %v2205 = vsel %vm1443, %v2182, 0.0
    %v2206 = vadd.f32 %v2204, %v2205
    %v2207 = vsel %vm1443, %v2183, 0.0
    %v2208 = vadd.f32 %v2206, %v2207
    %v2209 = vsel %vm1443, %v2184, 0.0
    %v2210 = vadd.f32 %v2208, %v2209
    %v2211 = vsel %vm1443, %v2185, 0.0
    %v2212 = vadd.f32 %v2210, %v2211
    %v2213 = vsel %vm1443, %v2186, 0.0
    %v2214 = vadd.f32 %v2212, %v2213
    %v2215 = vsel %vm1443, %v2187, 0.0
    %v2216 = vadd.f32 %v2214, %v2215
    %v2217 = vsel %vm1443, %v2188, 0.0
    %v2218 = vadd.f32 %v2216, %v2217
    %v2219 = vsel %vm1443, %v2189, 0.0
    %v2220 = vadd.f32 %v2218, %v2219
    %v2221 = vrot.slane %v2220, 4
    %v2222 = vadd.f32 %v2220, %v2221
    %v2223 = vrot.slane %v2222, 2
    %v2224 = vadd.f32 %v2222, %v2223
    %v2225 = vrot.slane %v2224, 1
    %v2226 = vadd.f32 %v2224, %v2225
    %vm2227 = vcmp.ge.f32.partialorder %v1393, %v2065
    %vm2228 = vcmp.ge.f32.partialorder %v1394, %v2065
    %vm2229 = vcmp.ge.f32.partialorder %v1395, %v2065
    %vm2230 = vcmp.ge.f32.partialorder %v1396, %v2065
    %vm2231 = vcmp.ge.f32.partialorder %v1397, %v2065
    %vm2232 = vcmp.ge.f32.partialorder %v1398, %v2065
    %vm2233 = vcmp.ge.f32.partialorder %v1399, %v2065
    %vm2234 = vcmp.ge.f32.partialorder %v1400, %v2065
    %vm2235 = vcmp.ge.f32.partialorder %v1401, %v2065
    %vm2236 = vcmp.ge.f32.partialorder %v1402, %v2065
    %vm2237 = vcmp.ge.f32.partialorder %v1403, %v2065
    %vm2238 = vcmp.ge.f32.partialorder %v1404, %v2065
    %vm2239 = vcmp.ge.f32.partialorder %v1405, %v2065
    %vm2240 = vcmp.ge.f32.partialorder %v1406, %v2065
    %vm2241 = vcmp.ge.f32.partialorder %v1407, %v2065
    %vm2242 = vcmp.ge.f32.partialorder %v1408, %v2065
    %v2243 = vsel %vm2227, %v1426, 128
    %v2244 = vsel %vm2228, %v1427, 128
    %v2245 = vsel %vm2229, %v1428, 128
    %v2246 = vsel %vm2230, %v1429, 128
    %v2247 = vsel %vm2231, %v1430, 128
    %v2248 = vsel %vm2232, %v1431, 128
    %v2249 = vsel %vm2233, %v1432, 128
    %v2250 = vsel %vm2234, %v1433, 128
    %v2251 = vsel %vm2235, %v1434, 128
    %v2252 = vsel %vm2236, %v1435, 128
    %v2253 = vsel %vm2237, %v1436, 128
    %v2254 = vsel %vm2238, %v1437, 128
    %v2255 = vsel %vm2239, %v1438, 128
    %v2256 = vsel %vm2240, %v1439, 128
    %v2257 = vsel %vm2241, %v1440, 128
    %v2258 = vsel %vm2242, %v1441, 128
    %v2259 = vsel %vm1443, %v2243, 2147483647
    %v2260 = vsel %vm1443, %v2244, 2147483647
    %v2261 = vsel %vm1443, %v2245, 2147483647
    %v2262 = vsel %vm1443, %v2246, 2147483647
    %v2263 = vsel %vm1443, %v2247, 2147483647
    %vm2264 = vcmp.lt.s32.totalorder %v2259, %v2263
    %v2265 = vsel %vm2264, %v2259, %v2263
    %v2266 = vsel %vm1443, %v2248, 2147483647
    %vm2267 = vcmp.lt.s32.totalorder %v2260, %v2266
    %v2268 = vsel %vm2267, %v2260, %v2266
    %v2269 = vsel %vm1443, %v2249, 2147483647
    %vm2270 = vcmp.lt.s32.totalorder %v2261, %v2269
    %v2271 = vsel %vm2270, %v2261, %v2269
    %v2272 = vsel %vm1443, %v2250, 2147483647
    %vm2273 = vcmp.lt.s32.totalorder %v2262, %v2272
    %v2274 = vsel %vm2273, %v2262, %v2272
    %v2275 = vsel %vm1443, %v2251, 2147483647
    %vm2276 = vcmp.lt.s32.totalorder %v2265, %v2275
    %v2277 = vsel %vm2276, %v2265, %v2275
    %v2278 = vsel %vm1443, %v2252, 2147483647
    %vm2279 = vcmp.lt.s32.totalorder %v2268, %v2278
    %v2280 = vsel %vm2279, %v2268, %v2278
    %v2281 = vsel %vm1443, %v2253, 2147483647
    %vm2282 = vcmp.lt.s32.totalorder %v2271, %v2281
    %v2283 = vsel %vm2282, %v2271, %v2281
    %v2284 = vsel %vm1443, %v2254, 2147483647
    %vm2285 = vcmp.lt.s32.totalorder %v2274, %v2284
    %v2286 = vsel %vm2285, %v2274, %v2284
    %v2287 = vsel %vm1443, %v2255, 2147483647
    %vm2288 = vcmp.lt.s32.totalorder %v2277, %v2287
    %v2289 = vsel %vm2288, %v2277, %v2287
    %v2290 = vsel %vm1443, %v2256, 2147483647
    %vm2291 = vcmp.lt.s32.totalorder %v2280, %v2290
    %v2292 = vsel %vm2291, %v2280, %v2290
    %v2293 = vsel %vm1443, %v2257, 2147483647
    %vm2294 = vcmp.lt.s32.totalorder %v2283, %v2293
    %v2295 = vsel %vm2294, %v2283, %v2293
    %v2296 = vsel %vm1443, %v2258, 2147483647
    %vm2297 = vcmp.lt.s32.totalorder %v2286, %v2296
    %v2298 = vsel %vm2297, %v2286, %v2296
    %vm2299 = vcmp.lt.s32.totalorder %v2289, %v2292
    %v2300 = vsel %vm2299, %v2289, %v2292
    %vm2301 = vcmp.lt.s32.totalorder %v2295, %v2298
    %v2302 = vsel %vm2301, %v2295, %v2298
    %vm2303 = vcmp.lt.s32.totalorder %v2300, %v2302
    %v2304 = vsel %vm2303, %v2300, %v2302
    %v2305 = vrot.slane %v2304, 4
    %vm2306 = vcmp.lt.s32.totalorder %v2304, %v2305
    %v2307 = vsel %vm2306, %v2304, %v2305
    %v2308 = vrot.slane %v2307, 2
    %vm2309 = vcmp.lt.s32.totalorder %v2307, %v2308
    %v2310 = vsel %vm2309, %v2307, %v2308
    %v2311 = vrot.slane %v2310, 1
    %vm2312 = vcmp.lt.s32.totalorder %v2310, %v2311
    %v2313 = vsel %vm2312, %v2310, %v2311
    %v2314 = vsub.f32 %v2153, %v2226
    %2315 = vst.msk [vmem:[%s7 + $0x2] sm:$0x1] %vm1730, %v2314
    %vm2316 = vcmp.eq.s32.totalorder %v2313, %v2028
    %v2317 = vsel %vm2316, 1, 0
    %v2318 = vcvt.s32.f32 %v2317
    %2319 = vst.msk [vmem:[%s8 + $0x2] sm:$0x1] %vm1730, %v2318
    %v2320 = vld [vmem:[%s0 + $0x3] sm:$0x1]
    %v2321 = vsel %vm1443, %v1409, -inf
    %v2322 = vsel %vm1443, %v1410, -inf
    %v2323 = vsel %vm1443, %v1411, -inf
    %v2324 = vsel %vm1443, %v1412, -inf
    %v2325 = vsel %vm1443, %v1413, -inf
    %v2326 = vmax.f32 %v2321, %v2325
    %v2327 = vsel %vm1443, %v1414, -inf
    %v2328 = vmax.f32 %v2322, %v2327
    %v2329 = vsel %vm1443, %v1415, -inf
    %v2330 = vmax.f32 %v2323, %v2329
    %v2331 = vsel %vm1443, %v1416, -inf
    %v2332 = vmax.f32 %v2324, %v2331
    %v2333 = vsel %vm1443, %v1417, -inf
    %v2334 = vmax.f32 %v2326, %v2333
    %v2335 = vsel %vm1443, %v1418, -inf
    %v2336 = vmax.f32 %v2328, %v2335
    %v2337 = vsel %vm1443, %v1419, -inf
    %v2338 = vmax.f32 %v2330, %v2337
    %v2339 = vsel %vm1443, %v1420, -inf
    %v2340 = vmax.f32 %v2332, %v2339
    %v2341 = vsel %vm1443, %v1421, -inf
    %v2342 = vmax.f32 %v2334, %v2341
    %v2343 = vsel %vm1443, %v1422, -inf
    %v2344 = vmax.f32 %v2336, %v2343
    %v2345 = vsel %vm1443, %v1423, -inf
    %v2346 = vmax.f32 %v2338, %v2345
    %v2347 = vsel %vm1443, %v1424, -inf
    %v2348 = vmax.f32 %v2340, %v2347
    %v2349 = vmax.f32 %v2342, %v2344
    %v2350 = vmax.f32 %v2346, %v2348
    %v2351 = vmax.f32 %v2349, %v2350
    %v2352 = vrot.slane %v2351, 4
    %v2353 = vmax.f32 %v2351, %v2352
    %v2354 = vrot.slane %v2353, 2
    %v2355 = vmax.f32 %v2353, %v2354
    %v2356 = vrot.slane %v2355, 1
    %v2357 = vmax.f32 %v2355, %v2356
    %v2358 = vsub.f32 %v1409, %v2357
    %v2359 = vsub.f32 %v1410, %v2357
    %v2360 = vsub.f32 %v1411, %v2357
    %v2361 = vsub.f32 %v1412, %v2357
    %v2362 = vsub.f32 %v1413, %v2357
    %v2363 = vsub.f32 %v1414, %v2357
    %v2364 = vsub.f32 %v1415, %v2357
    %v2365 = vsub.f32 %v1416, %v2357
    %v2366 = vsub.f32 %v1417, %v2357
    %v2367 = vsub.f32 %v1418, %v2357
    %v2368 = vsub.f32 %v1419, %v2357
    %v2369 = vsub.f32 %v1420, %v2357
    %v2370 = vsub.f32 %v1421, %v2357
    %v2371 = vsub.f32 %v1422, %v2357
    %v2372 = vsub.f32 %v1423, %v2357
    %v2373 = vsub.f32 %v1424, %v2357
    %v2374 = vmul.f32 %v2358, 1.442695
    %v2375 = vpow.pop %v2374
    %v2376 = vmul.f32 %v2359, 1.442695
    %v2377 = vpow.pop %v2376
    %v2378 = vmul.f32 %v2360, 1.442695
    %v2379 = vpow.pop %v2378
    %v2380 = vmul.f32 %v2361, 1.442695
    %v2381 = vpow.pop %v2380
    %v2382 = vmul.f32 %v2362, 1.442695
    %v2383 = vpow.pop %v2382
    %v2384 = vmul.f32 %v2363, 1.442695
    %v2385 = vpow.pop %v2384
    %v2386 = vmul.f32 %v2364, 1.442695
    %v2387 = vpow.pop %v2386
    %v2388 = vmul.f32 %v2365, 1.442695
    %v2389 = vpow.pop %v2388
    %v2390 = vmul.f32 %v2366, 1.442695
    %v2391 = vpow.pop %v2390
    %v2392 = vmul.f32 %v2367, 1.442695
    %v2393 = vpow.pop %v2392
    %v2394 = vmul.f32 %v2368, 1.442695
    %v2395 = vpow.pop %v2394
    %v2396 = vmul.f32 %v2369, 1.442695
    %v2397 = vpow.pop %v2396
    %v2398 = vmul.f32 %v2370, 1.442695
    %v2399 = vpow.pop %v2398
    %v2400 = vmul.f32 %v2371, 1.442695
    %v2401 = vpow.pop %v2400
    %v2402 = vmul.f32 %v2372, 1.442695
    %v2403 = vpow.pop %v2402
    %v2404 = vmul.f32 %v2373, 1.442695
    %v2405 = vpow.pop %v2404
    %v2406 = vsel %vm1443, %v2375, 0.0
    %v2407 = vsel %vm1443, %v2377, 0.0
    %v2408 = vadd.f32 %v2406, %v2407
    %v2409 = vsel %vm1443, %v2379, 0.0
    %v2410 = vadd.f32 %v2408, %v2409
    %v2411 = vsel %vm1443, %v2381, 0.0
    %v2412 = vadd.f32 %v2410, %v2411
    %v2413 = vsel %vm1443, %v2383, 0.0
    %v2414 = vadd.f32 %v2412, %v2413
    %v2415 = vsel %vm1443, %v2385, 0.0
    %v2416 = vadd.f32 %v2414, %v2415
    %v2417 = vsel %vm1443, %v2387, 0.0
    %v2418 = vadd.f32 %v2416, %v2417
    %v2419 = vsel %vm1443, %v2389, 0.0
    %v2420 = vadd.f32 %v2418, %v2419
    %v2421 = vsel %vm1443, %v2391, 0.0
    %v2422 = vadd.f32 %v2420, %v2421
    %v2423 = vsel %vm1443, %v2393, 0.0
    %v2424 = vadd.f32 %v2422, %v2423
    %v2425 = vsel %vm1443, %v2395, 0.0
    %v2426 = vadd.f32 %v2424, %v2425
    %v2427 = vsel %vm1443, %v2397, 0.0
    %v2428 = vadd.f32 %v2426, %v2427
    %v2429 = vsel %vm1443, %v2399, 0.0
    %v2430 = vadd.f32 %v2428, %v2429
    %v2431 = vsel %vm1443, %v2401, 0.0
    %v2432 = vadd.f32 %v2430, %v2431
    %v2433 = vsel %vm1443, %v2403, 0.0
    %v2434 = vadd.f32 %v2432, %v2433
    %v2435 = vsel %vm1443, %v2405, 0.0
    %v2436 = vadd.f32 %v2434, %v2435
    %v2437 = vrot.slane %v2436, 4
    %v2438 = vadd.f32 %v2436, %v2437
    %v2439 = vrot.slane %v2438, 2
    %v2440 = vadd.f32 %v2438, %v2439
    %v2441 = vrot.slane %v2440, 1
    %v2442 = vadd.f32 %v2440, %v2441
    %v2443 = vlog2.pop %v2442
    %v2444 = vmul.f32 %v2443, 0.6931472
    %v2445 = vadd.f32 %v2357, %v2444
    %v2446 = vlaneseq
    %v2447 = vshrl.u32 %v2446, 7
    %v2448 = vsub.s32 0, %v2447
    %v2449 = vrot.slane %v2320, %v2448
    %vm2450 = vcmp.eq.s32.totalorder %v1426, %v2449
    %vm2451 = vcmp.eq.s32.totalorder %v1427, %v2449
    %vm2452 = vcmp.eq.s32.totalorder %v1428, %v2449
    %vm2453 = vcmp.eq.s32.totalorder %v1429, %v2449
    %vm2454 = vcmp.eq.s32.totalorder %v1430, %v2449
    %vm2455 = vcmp.eq.s32.totalorder %v1431, %v2449
    %vm2456 = vcmp.eq.s32.totalorder %v1432, %v2449
    %vm2457 = vcmp.eq.s32.totalorder %v1433, %v2449
    %vm2458 = vcmp.eq.s32.totalorder %v1434, %v2449
    %vm2459 = vcmp.eq.s32.totalorder %v1435, %v2449
    %vm2460 = vcmp.eq.s32.totalorder %v1436, %v2449
    %vm2461 = vcmp.eq.s32.totalorder %v1437, %v2449
    %vm2462 = vcmp.eq.s32.totalorder %v1438, %v2449
    %vm2463 = vcmp.eq.s32.totalorder %v1439, %v2449
    %vm2464 = vcmp.eq.s32.totalorder %v1440, %v2449
    %vm2465 = vcmp.eq.s32.totalorder %v1441, %v2449
    %v2466 = vsel %vm2450, %v1409, 0.0
    %v2467 = vsel %vm2451, %v1410, 0.0
    %v2468 = vsel %vm2452, %v1411, 0.0
    %v2469 = vsel %vm2453, %v1412, 0.0
    %v2470 = vsel %vm2454, %v1413, 0.0
    %v2471 = vsel %vm2455, %v1414, 0.0
    %v2472 = vsel %vm2456, %v1415, 0.0
    %v2473 = vsel %vm2457, %v1416, 0.0
    %v2474 = vsel %vm2458, %v1417, 0.0
    %v2475 = vsel %vm2459, %v1418, 0.0
    %v2476 = vsel %vm2460, %v1419, 0.0
    %v2477 = vsel %vm2461, %v1420, 0.0
    %v2478 = vsel %vm2462, %v1421, 0.0
    %v2479 = vsel %vm2463, %v1422, 0.0
    %v2480 = vsel %vm2464, %v1423, 0.0
    %v2481 = vsel %vm2465, %v1424, 0.0
    %v2482 = vsel %vm1443, %v2466, 0.0
    %v2483 = vsel %vm1443, %v2467, 0.0
    %v2484 = vadd.f32 %v2482, %v2483
    %v2485 = vsel %vm1443, %v2468, 0.0
    %v2486 = vadd.f32 %v2484, %v2485
    %v2487 = vsel %vm1443, %v2469, 0.0
    %v2488 = vadd.f32 %v2486, %v2487
    %v2489 = vsel %vm1443, %v2470, 0.0
    %v2490 = vadd.f32 %v2488, %v2489
    %v2491 = vsel %vm1443, %v2471, 0.0
    %v2492 = vadd.f32 %v2490, %v2491
    %v2493 = vsel %vm1443, %v2472, 0.0
    %v2494 = vadd.f32 %v2492, %v2493
    %v2495 = vsel %vm1443, %v2473, 0.0
    %v2496 = vadd.f32 %v2494, %v2495
    %v2497 = vsel %vm1443, %v2474, 0.0
    %v2498 = vadd.f32 %v2496, %v2497
    %v2499 = vsel %vm1443, %v2475, 0.0
    %v2500 = vadd.f32 %v2498, %v2499
    %v2501 = vsel %vm1443, %v2476, 0.0
    %v2502 = vadd.f32 %v2500, %v2501
    %v2503 = vsel %vm1443, %v2477, 0.0
    %v2504 = vadd.f32 %v2502, %v2503
    %v2505 = vsel %vm1443, %v2478, 0.0
    %v2506 = vadd.f32 %v2504, %v2505
    %v2507 = vsel %vm1443, %v2479, 0.0
    %v2508 = vadd.f32 %v2506, %v2507
    %v2509 = vsel %vm1443, %v2480, 0.0
    %v2510 = vadd.f32 %v2508, %v2509
    %v2511 = vsel %vm1443, %v2481, 0.0
    %v2512 = vadd.f32 %v2510, %v2511
    %v2513 = vrot.slane %v2512, 4
    %v2514 = vadd.f32 %v2512, %v2513
    %v2515 = vrot.slane %v2514, 2
    %v2516 = vadd.f32 %v2514, %v2515
    %v2517 = vrot.slane %v2516, 1
    %v2518 = vadd.f32 %v2516, %v2517
    %vm2519 = vcmp.ge.f32.partialorder %v1409, %v2357
    %vm2520 = vcmp.ge.f32.partialorder %v1410, %v2357
    %vm2521 = vcmp.ge.f32.partialorder %v1411, %v2357
    %vm2522 = vcmp.ge.f32.partialorder %v1412, %v2357
    %vm2523 = vcmp.ge.f32.partialorder %v1413, %v2357
    %vm2524 = vcmp.ge.f32.partialorder %v1414, %v2357
    %vm2525 = vcmp.ge.f32.partialorder %v1415, %v2357
    %vm2526 = vcmp.ge.f32.partialorder %v1416, %v2357
    %vm2527 = vcmp.ge.f32.partialorder %v1417, %v2357
    %vm2528 = vcmp.ge.f32.partialorder %v1418, %v2357
    %vm2529 = vcmp.ge.f32.partialorder %v1419, %v2357
    %vm2530 = vcmp.ge.f32.partialorder %v1420, %v2357
    %vm2531 = vcmp.ge.f32.partialorder %v1421, %v2357
    %vm2532 = vcmp.ge.f32.partialorder %v1422, %v2357
    %vm2533 = vcmp.ge.f32.partialorder %v1423, %v2357
    %vm2534 = vcmp.ge.f32.partialorder %v1424, %v2357
    %v2535 = vsel %vm2519, %v1426, 128
    %v2536 = vsel %vm2520, %v1427, 128
    %v2537 = vsel %vm2521, %v1428, 128
    %v2538 = vsel %vm2522, %v1429, 128
    %v2539 = vsel %vm2523, %v1430, 128
    %v2540 = vsel %vm2524, %v1431, 128
    %v2541 = vsel %vm2525, %v1432, 128
    %v2542 = vsel %vm2526, %v1433, 128
    %v2543 = vsel %vm2527, %v1434, 128
    %v2544 = vsel %vm2528, %v1435, 128
    %v2545 = vsel %vm2529, %v1436, 128
    %v2546 = vsel %vm2530, %v1437, 128
    %v2547 = vsel %vm2531, %v1438, 128
    %v2548 = vsel %vm2532, %v1439, 128
    %v2549 = vsel %vm2533, %v1440, 128
    %v2550 = vsel %vm2534, %v1441, 128
    %v2551 = vsel %vm1443, %v2535, 2147483647
    %v2552 = vsel %vm1443, %v2536, 2147483647
    %v2553 = vsel %vm1443, %v2537, 2147483647
    %v2554 = vsel %vm1443, %v2538, 2147483647
    %v2555 = vsel %vm1443, %v2539, 2147483647
    %vm2556 = vcmp.lt.s32.totalorder %v2551, %v2555
    %v2557 = vsel %vm2556, %v2551, %v2555
    %v2558 = vsel %vm1443, %v2540, 2147483647
    %vm2559 = vcmp.lt.s32.totalorder %v2552, %v2558
    %v2560 = vsel %vm2559, %v2552, %v2558
    %v2561 = vsel %vm1443, %v2541, 2147483647
    %vm2562 = vcmp.lt.s32.totalorder %v2553, %v2561
    %v2563 = vsel %vm2562, %v2553, %v2561
    %v2564 = vsel %vm1443, %v2542, 2147483647
    %vm2565 = vcmp.lt.s32.totalorder %v2554, %v2564
    %v2566 = vsel %vm2565, %v2554, %v2564
    %v2567 = vsel %vm1443, %v2543, 2147483647
    %vm2568 = vcmp.lt.s32.totalorder %v2557, %v2567
    %v2569 = vsel %vm2568, %v2557, %v2567
    %v2570 = vsel %vm1443, %v2544, 2147483647
    %vm2571 = vcmp.lt.s32.totalorder %v2560, %v2570
    %v2572 = vsel %vm2571, %v2560, %v2570
    %v2573 = vsel %vm1443, %v2545, 2147483647
    %vm2574 = vcmp.lt.s32.totalorder %v2563, %v2573
    %v2575 = vsel %vm2574, %v2563, %v2573
    %v2576 = vsel %vm1443, %v2546, 2147483647
    %vm2577 = vcmp.lt.s32.totalorder %v2566, %v2576
    %v2578 = vsel %vm2577, %v2566, %v2576
    %v2579 = vsel %vm1443, %v2547, 2147483647
    %vm2580 = vcmp.lt.s32.totalorder %v2569, %v2579
    %v2581 = vsel %vm2580, %v2569, %v2579
    %v2582 = vsel %vm1443, %v2548, 2147483647
    %vm2583 = vcmp.lt.s32.totalorder %v2572, %v2582
    %v2584 = vsel %vm2583, %v2572, %v2582
    %v2585 = vsel %vm1443, %v2549, 2147483647
    %vm2586 = vcmp.lt.s32.totalorder %v2575, %v2585
    %v2587 = vsel %vm2586, %v2575, %v2585
    %v2588 = vsel %vm1443, %v2550, 2147483647
    %vm2589 = vcmp.lt.s32.totalorder %v2578, %v2588
    %v2590 = vsel %vm2589, %v2578, %v2588
    %vm2591 = vcmp.lt.s32.totalorder %v2581, %v2584
    %v2592 = vsel %vm2591, %v2581, %v2584
    %vm2593 = vcmp.lt.s32.totalorder %v2587, %v2590
    %v2594 = vsel %vm2593, %v2587, %v2590
    %vm2595 = vcmp.lt.s32.totalorder %v2592, %v2594
    %v2596 = vsel %vm2595, %v2592, %v2594
    %v2597 = vrot.slane %v2596, 4
    %vm2598 = vcmp.lt.s32.totalorder %v2596, %v2597
    %v2599 = vsel %vm2598, %v2596, %v2597
    %v2600 = vrot.slane %v2599, 2
    %vm2601 = vcmp.lt.s32.totalorder %v2599, %v2600
    %v2602 = vsel %vm2601, %v2599, %v2600
    %v2603 = vrot.slane %v2602, 1
    %vm2604 = vcmp.lt.s32.totalorder %v2602, %v2603
    %v2605 = vsel %vm2604, %v2602, %v2603
    %v2606 = vsub.f32 %v2445, %v2518
    %2607 = vst.msk [vmem:[%s7 + $0x3] sm:$0x1] %vm1730, %v2606
    %vm2608 = vcmp.eq.s32.totalorder %v2605, %v2320
    %v2609 = vsel %vm2608, 1, 0
    %v2610 = vcvt.s32.f32 %v2609
    %2611 = vst.msk [vmem:[%s8 + $0x3] sm:$0x1] %vm1730, %v2610
    // Predicated region
    $region30: #{_forward_impl.1} parent=1 // pred_check
      _
    $region31: #{_forward_impl.1} parent=1 // pred_check_branch
      %2613 = sbr.rel (0) target = $region33
    $region32: #{_forward_impl.1} parent=1 // pred_region
      _
    $region33: #{_forward_impl.1} parent=1 // pred_fallthru
      _
    // Predicated region
    $region34: #{_forward_impl.1} parent=1 // pred_check
      _
    $region35: #{_forward_impl.1} parent=1 // pred_check_branch
      %2615 = sbr.rel (0) target = $region37
    $region36: #{_forward_impl.1} parent=1 // pred_region
      _
    $region37: #{_forward_impl.1} parent=1 // pred_fallthru
      _
    // Predicated region
    $region38: #{_forward_impl.1} parent=1 // pred_check
      _
    $region39: #{_forward_impl.1} parent=1 // pred_check_branch
      %2617 = sbr.rel (0) target = $region41
    $region40: #{_forward_impl.1} parent=1 // pred_region
      _
    $region41: #{_forward_impl.1} parent=1 // pred_fallthru
      _
    // Predicated region
    $region42: #{_forward_impl.1} parent=1 // pred_check
      _
    $region43: #{_forward_impl.1} parent=1 // pred_check_branch
      %2619 = sbr.rel (0) target = $region45
    $region44: #{_forward_impl.1} parent=1 // pred_region
      _
    $region45: #{_forward_impl.1} parent=1 // pred_fallthru
      _
    // Predicated region
    $region46: #{_forward_impl.1} parent=1 // pred_check
      _
    $region47: #{_forward_impl.1} parent=1 // pred_check_branch
      %2621 = sbr.rel (0) target = $region49
    $region48: #{_forward_impl.1} parent=1 // pred_region
      _
    $region49: #{_forward_impl.1} parent=1 // pred_fallthru
      _
    // Predicated region
    $region50: #{_forward_impl.1} parent=1 // pred_check
      _
    $region51: #{_forward_impl.1} parent=1 // pred_check_branch
      %2623 = sbr.rel (0) target = $region53
    $region52: #{_forward_impl.1} parent=1 // pred_region
      _
    $region53: #{_forward_impl.1} parent=1 // pred_fallthru
      _
    %2624 = vsyncpa [#allocation3], 1

</llo_original>
